<compile_context>
chip_gen: v5e
topology: v5e:2x2
jax: 0.10.0
libtpu: 0.0.40
codegen_flags: <defaults>
</compile_context>

<pallas_src>
import numpy as np
import jax
import jax.numpy as jnp
from jax import lax
from jax.experimental import pallas as pl
from jax.experimental.pallas import tpu as pltpu

# ----------------------- hyper-parameters (small demo sizes) -----------------------
D_MODEL = 128          # (512 in the reference; shrunk for the small-shape demo)
N_HEAD = 4             # (8)
D_K = D_V = 32         # (64)   N_HEAD * D_K == D_MODEL -> lane-dense [*, 128] layout
D_FF = 256             # (2048)
N_LAYERS = 2           # (6)
SRC_VOCA_SIZE = 5
BATCH = 2
SRC_LEN = 8            # (5 in the reference; 8 keeps sublane-aligned tiles)
LN_EPS = 1e-5

# weight key order shared between wrapper and kernel signature
_LAYER_W_ORDER = ("wqkv", "bqkv", "wo", "bo", "ln1_g", "ln1_b",
                  "w1", "b1", "w2", "b2", "ln2_g", "ln2_b")


def _layernorm(h, g, b):
    """LayerNorm over last dim, f32 math.  h: (M, D); g, b: (1, D)."""
    mean = jnp.mean(h, axis=-1, keepdims=True)
    var = jnp.mean(jnp.square(h - mean), axis=-1, keepdims=True)
    return (h - mean) * lax.rsqrt(var + LN_EPS) * g + b


# =========================== fused all-layers encoder kernel =======================

def _make_encoder_kernel(return_attn):
    def kernel(x_ref, bias_ref,
               wqkv_ref, bqkv_ref, wo_ref, bo_ref, ln1g_ref, ln1b_ref,
               w1_ref, b1_ref, w2_ref, b2_ref, ln2g_ref, ln2b_ref,
               y_ref, *maybe_attn):
        attn_ref = maybe_attn[0] if return_attn else None
        l = pl.program_id(0)

        # layer-0: seed the resident activation block (y_ref is the carry across l)
        @pl.when(l == 0)
        def _():
            y_ref[...] = x_ref[...]

        x = y_ref[...]                       # (B*S, D) f32 current layer input
        key_bias = bias_ref[...]             # (B, S)  f32 additive key bias (-1e9 pads)
        xb = x.astype(jnp.bfloat16)

        # ---- fused QKV projection over all batch rows (scale folded into wq/bq) ----
        qkv = jnp.dot(xb, wqkv_ref[0], preferred_element_type=jnp.float32)
        qkv = qkv + bqkv_ref[0]              # (B*S, 3*D)
        wo = wo_ref[0]                       # (D, D) bf16

        # ---- per-batch attention; output projection accumulated per head ----------
        out_rows = []
        attn_rows = []
        for b in range(BATCH):
            rows = slice(b * SRC_LEN, (b + 1) * SRC_LEN)
            kb = key_bias[b:b + 1, :]        # (1, S) broadcast over queries
            acc = None
            heads = []
            for h in range(N_HEAD):
                q = qkv[rows, h * D_K:(h + 1) * D_K].astype(jnp.bfloat16)
                k = qkv[rows, D_MODEL + h * D_K:D_MODEL + (h + 1) * D_K].astype(jnp.bfloat16)
                v = qkv[rows, 2 * D_MODEL + h * D_V:2 * D_MODEL + (h + 1) * D_V].astype(jnp.bfloat16)
                # contract last dims -> no kh.T transpose
                score = lax.dot_general(q, k, (((1,), (1,)), ((), ())),
                                        preferred_element_type=jnp.float32)
                score = score + kb           # masked_fill(pad_key, -1e9) equivalent
                smax = jnp.max(score, axis=-1, keepdims=True)
                e = jnp.exp(score - smax)
                attn = e * pl.reciprocal(jnp.sum(e, axis=-1, keepdims=True),
                                         approx=True)          # softmax, f32
                if return_attn:
                    heads.append(attn)
                ctx = jnp.dot(attn.astype(jnp.bfloat16), v,
                              preferred_element_type=jnp.float32)       # (S, dv)
                # output-projection contribution of this head (no ctx concatenate)
                contrib = jnp.dot(ctx.astype(jnp.bfloat16),
                                  wo[h * D_V:(h + 1) * D_V, :],
                                  preferred_element_type=jnp.float32)   # (S, D)
                acc = contrib if acc is None else acc + contrib
            out_rows.append(acc)
            if return_attn:
                attn_rows.append(jnp.concatenate(heads, axis=0))        # (H*S, S)

        if return_attn:
            # single slab store per layer; host reshapes to (B, H, S, S)
            attn_ref[0] = jnp.concatenate(attn_rows, axis=0)            # (B*H*S, S)

        # ---- output projection bias + residual + LayerNorm ----
        # TODO(synk): reference does `nn.LayerNorm(output + residual)` (constructs a
        # module, never applies it) and builds the output Linear inside forward; we
        # apply a real LayerNorm with per-layer params -- the intended semantics.
        out = jnp.concatenate(out_rows, axis=0) + bo_ref[0]             # (B*S, D)
        a1 = _layernorm(out + x, ln1g_ref[0], ln1b_ref[0])

        # ---- position-wise FFN (Conv1d k=1 == per-token Linear) + residual + LN ----
        hid = jnp.dot(a1.astype(jnp.bfloat16), w1_ref[0],
                      preferred_element_type=jnp.float32) + b1_ref[0]
        hid = jnp.maximum(hid, 0.0)                                     # ReLU
        ff = jnp.dot(hid.astype(jnp.bfloat16), w2_ref[0],
                     preferred_element_type=jnp.float32) + b2_ref[0]
        y_ref[...] = _layernorm(ff + a1, ln2g_ref[0], ln2b_ref[0])
    return kernel


def encoder_pallas(x, key_bias, stacked, return_attn=True):
    """All encoder layers in one pallas_call.

    x: (B, S, D) f32 embeddings; key_bias: (B, S) f32 additive pad bias;
    stacked: dict of (L, ...) weight arrays.
    """
    B, S, D = x.shape
    M = B * S
    x2 = x.reshape(M, D)
    L = stacked["wqkv"].shape[0]

    def _wspec(a):
        nd = a.ndim
        # one layer's weights at a time (streams per layer; only 1 layer + double
        # buffer resident in VMEM -- matters at reference sizes on v7x)
        return pl.BlockSpec((1,) + a.shape[1:], lambda l, _nd=nd: (l,) + (0,) * (_nd - 1))

    in_specs = [
        pl.BlockSpec((M, D), lambda l: (0, 0)),      # x (read at l==0 only)
        pl.BlockSpec((B, S), lambda l: (0, 0)),      # additive key-pad bias
    ] + [_wspec(stacked[k]) for k in _LAYER_W_ORDER]

    y_shape = jax.ShapeDtypeStruct((M, D), jnp.float32)
    y_spec = pl.BlockSpec((M, D), lambda l: (0, 0))  # resident across layer axis

    if return_attn:
        out_shape = (y_shape,
                     jax.ShapeDtypeStruct((L, B * N_HEAD * S, S), jnp.float32))
        out_specs = (y_spec,
                     pl.BlockSpec((1, B * N_HEAD * S, S), lambda l: (l, 0, 0)))
    else:
        out_shape = y_shape
        out_specs = y_spec

    # ---- advisory cost estimate so XLA overlaps surrounding ops ----
    flops_layer = (2 * M * D * 3 * D                                    # QKV proj
                   + B * N_HEAD * (2 * S * S * D_K + 2 * S * S * D_V)   # attention
                   + 2 * M * D * D                                      # out proj
                   + 2 * M * D * D_FF * 2)                              # FFN
    transcendentals = L * (B * N_HEAD * S * S + B * N_HEAD * S + 2 * M)
    bytes_accessed = (x2.size * 4 * 2 + key_bias.size * 4
                      + sum(int(np.prod(stacked[k].shape)) * stacked[k].dtype.itemsize
                            for k in _LAYER_W_ORDER)
                      + (L * B * N_HEAD * S * S * 4 if return_attn else 0))
    cost = pl.CostEstimate(flops=int(L * flops_layer),
                           transcendentals=int(transcendentals),
                           bytes_accessed=int(bytes_accessed))

    result = pl.pallas_call(
        _make_encoder_kernel(return_attn),
        grid=(L,),
        out_shape=out_shape,
        in_specs=in_specs,
        out_specs=out_specs,
        compiler_params=pltpu.CompilerParams(
            dimension_semantics=("arbitrary",)),     # layer axis carries the activation
        cost_estimate=cost,
    )(x2, key_bias, *(stacked[k] for k in _LAYER_W_ORDER))

    if return_attn:
        y2, attn_flat = result
        attn = attn_flat.reshape(L, B, N_HEAD, S, S)
        return y2.reshape(B, S, D), [attn[l] for l in range(L)]
    return result.reshape(B, S, D), None


# =============================== model glue (plain JAX) =============================

def get_sinusoid_encoding_table(n_position, d_model):
    pos = np.arange(n_position)[:, None].astype(np.float64)
    hid = np.arange(d_model)[None, :]
    angle = pos / np.power(10000, 2 * (hid // 2) / d_model)
    table = np.zeros((n_position, d_model), dtype=np.float64)
    table[:, 0::2] = np.sin(angle[:, 0::2])
    table[:, 1::2] = np.cos(angle[:, 1::2])
    return jnp.asarray(table, dtype=jnp.float32)


def get_attn_key_pad_bias(seq_k):
    """Additive -1e9 bias per KEY token that is padding.  Returns (B, Lk) f32."""
    return jnp.where(seq_k == 0, jnp.float32(-1e9), jnp.float32(0.0))


def encoder_forward(params, enc_input, return_attn=True):
    B, S = enc_input.shape
    # TODO(synk): reference calls pos_emb with hard-coded indices [[1,2,3,4,0]]; we
    # index the frozen sinusoid table by position (the intended semantics).
    x = params["src_emb"][enc_input] + params["pos_table"][jnp.arange(S)][None, :, :]
    key_bias = get_attn_key_pad_bias(enc_input)
    return encoder_pallas(x, key_bias, params["enc_layers"], return_attn=return_attn)


# =============================== parameter init ====================================

def _dense_init(key, fan_in, fan_out):
    k1, k2 = jax.random.split(key)
    bound = 1.0 / np.sqrt(fan_in)
    w = jax.random.uniform(k1, (fan_in, fan_out), jnp.float32, -bound, bound)
    b = jax.random.uniform(k2, (fan_out,), jnp.float32, -bound, bound)
    return w, b


def init_params(key):
    keys = iter(jax.random.split(key, 64))
    scale = 1.0 / np.sqrt(D_K)

    def layer_params():
        wq, bq = _dense_init(next(keys), D_MODEL, D_K * N_HEAD)
        wk, bk = _dense_init(next(keys), D_MODEL, D_K * N_HEAD)
        wv, bv = _dense_init(next(keys), D_MODEL, D_V * N_HEAD)
        wo, bo = _dense_init(next(keys), N_HEAD * D_V, D_MODEL)
        w1, b1 = _dense_init(next(keys), D_MODEL, D_FF)
        w2, b2 = _dense_init(next(keys), D_FF, D_MODEL)
        # fuse Q|K|V and fold the 1/sqrt(d_k) attention scale into the Q projection;
        # weights bf16 (MXU operands), biases / LN params f32 (added post-accumulation)
        wqkv = jnp.concatenate([wq * scale, wk, wv], axis=1).astype(jnp.bfloat16)
        bqkv = jnp.concatenate([bq * scale, bk, bv]).reshape(1, 3 * D_MODEL)
        return dict(
            wqkv=wqkv, bqkv=bqkv.astype(jnp.float32),
            wo=wo.astype(jnp.bfloat16), bo=bo.reshape(1, D_MODEL),
            ln1_g=jnp.ones((1, D_MODEL), jnp.float32),
            ln1_b=jnp.zeros((1, D_MODEL), jnp.float32),
            w1=w1.astype(jnp.bfloat16), b1=b1.reshape(1, D_FF),
            w2=w2.astype(jnp.bfloat16), b2=b2.reshape(1, D_MODEL),
            ln2_g=jnp.ones((1, D_MODEL), jnp.float32),
            ln2_b=jnp.zeros((1, D_MODEL), jnp.float32),
        )

    layers = [layer_params() for _ in range(N_LAYERS)]
    stacked = {k: jnp.stack([lp[k] for lp in layers], axis=0) for k in _LAYER_W_ORDER}

    return dict(
        src_emb=jax.random.normal(next(keys), (SRC_VOCA_SIZE, D_MODEL), jnp.float32),
        pos_table=get_sinusoid_encoding_table(SRC_LEN + 1, D_MODEL),
        enc_layers=stacked,
    )


# =============================== main ===============================================

if __name__ == "__main__":
    key = jax.random.PRNGKey(0)
    params = init_params(key)

    # token ids (0 is the padding index used by the pad mask)
    enc_input = jnp.array([[1, 2, 3, 4, 2, 1, 0, 0],
                           [2, 3, 1, 4, 0, 0, 0, 0]], dtype=jnp.int32)   # (B, SRC_LEN)

    fwd = jax.jit(lambda p, t: encoder_forward(p, t, return_attn=True))
    enc_output, enc_self_attns = fwd(params, enc_input)

    jax.block_until_ready(enc_output)
    assert enc_output.shape == (BATCH, SRC_LEN, D_MODEL)
    assert len(enc_self_attns) == N_LAYERS
    assert enc_self_attns[0].shape == (BATCH, N_HEAD, SRC_LEN, SRC_LEN)
    assert np.all(np.isfinite(np.asarray(enc_output)))
    assert np.all(np.isfinite(np.asarray(enc_self_attns[0])))
    # rows of each attention matrix must sum to ~1 (softmax sanity)
    row_sums = np.asarray(enc_self_attns[0]).sum(-1)
    assert np.allclose(row_sums, 1.0, atol=1e-2)
    print("KERNEL_OK")
</pallas_src>

<mosaic_0001>
module attributes {stable_mosaic.version = 11 : i64} {
  func.func @kernel(%arg0: i32, %arg1: memref<16x128xf32, #tpu.memory_space<vmem>>, %arg2: memref<2x8xf32, #tpu.memory_space<vmem>>, %arg3: memref<1x128x384xbf16, #tpu.memory_space<vmem>>, %arg4: memref<1x1x384xf32, #tpu.memory_space<vmem>>, %arg5: memref<1x128x128xbf16, #tpu.memory_space<vmem>>, %arg6: memref<1x1x128xf32, #tpu.memory_space<vmem>>, %arg7: memref<1x1x128xf32, #tpu.memory_space<vmem>>, %arg8: memref<1x1x128xf32, #tpu.memory_space<vmem>>, %arg9: memref<1x128x256xbf16, #tpu.memory_space<vmem>>, %arg10: memref<1x1x256xf32, #tpu.memory_space<vmem>>, %arg11: memref<1x256x128xbf16, #tpu.memory_space<vmem>>, %arg12: memref<1x1x128xf32, #tpu.memory_space<vmem>>, %arg13: memref<1x1x128xf32, #tpu.memory_space<vmem>>, %arg14: memref<1x1x128xf32, #tpu.memory_space<vmem>>, %arg15: memref<16x128xf32, #tpu.memory_space<vmem>>, %arg16: memref<1x64x8xf32, #tpu.memory_space<vmem>>) attributes {dimension_semantics = [#tpu.dimension_semantics<arbitrary>], iteration_bounds = array<i64: 2>, scalar_prefetch = 0 : i64, scratch_operands = 0 : i64, tpu.core_type = #tpu.core_type<tc>, window_params = [{pipeline_mode = #tpu.pipeline_mode<synchronous>, transform_indices = @transform_0, window_bounds = array<i64: 16, 128>}, {pipeline_mode = #tpu.pipeline_mode<synchronous>, transform_indices = @transform_1, window_bounds = array<i64: 2, 8>}, {transform_indices = @transform_2, window_bounds = array<i64: 1, 128, 384>}, {transform_indices = @transform_3, window_bounds = array<i64: 1, 1, 384>}, {transform_indices = @transform_4, window_bounds = array<i64: 1, 128, 128>}, {transform_indices = @transform_5, window_bounds = array<i64: 1, 1, 128>}, {transform_indices = @transform_6, window_bounds = array<i64: 1, 1, 128>}, {transform_indices = @transform_7, window_bounds = array<i64: 1, 1, 128>}, {transform_indices = @transform_8, window_bounds = array<i64: 1, 128, 256>}, {transform_indices = @transform_9, window_bounds = array<i64: 1, 1, 256>}, {transform_indices = @transform_10, window_bounds = array<i64: 1, 256, 128>}, {transform_indices = @transform_11, window_bounds = array<i64: 1, 1, 128>}, {transform_indices = @transform_12, window_bounds = array<i64: 1, 1, 128>}, {transform_indices = @transform_13, window_bounds = array<i64: 1, 1, 128>}, {pipeline_mode = #tpu.pipeline_mode<synchronous>, transform_indices = @transform_14, window_bounds = array<i64: 16, 128>}, {transform_indices = @transform_15, window_bounds = array<i64: 1, 64, 8>}]} {
    %c0_i32 = arith.constant 0 : i32
    %0 = arith.cmpi eq, %arg0, %c0_i32 : i32
    %1 = arith.extui %0 : i1 to i32
    %c0_i32_0 = arith.constant 0 : i32
    %2 = arith.cmpi ne, %1, %c0_i32_0 : i32
    scf.if %2 {
      %c0_98 = arith.constant 0 : index
      %c0_99 = arith.constant 0 : index
      %299 = vector.load %arg1[%c0_98, %c0_99] : memref<16x128xf32, #tpu.memory_space<vmem>>, vector<16x128xf32>
      %c0_100 = arith.constant 0 : index
      %c0_101 = arith.constant 0 : index
      %300 = vector.load %arg15[%c0_100, %c0_101] : memref<16x128xf32, #tpu.memory_space<vmem>>, vector<16x128xf32>
      tpu.vector_store %arg15[%c0_100, %c0_101], %299 {strides = array<i32>} : memref<16x128xf32, #tpu.memory_space<vmem>>, vector<16x128xf32>,
    } else {
    }
    %c0 = arith.constant 0 : index
    %c0_1 = arith.constant 0 : index
    %3 = vector.load %arg15[%c0, %c0_1] : memref<16x128xf32, #tpu.memory_space<vmem>>, vector<16x128xf32>
    %c0_2 = arith.constant 0 : index
    %c0_3 = arith.constant 0 : index
    %4 = vector.load %arg2[%c0_2, %c0_3] : memref<2x8xf32, #tpu.memory_space<vmem>>, vector<2x8xf32>
    %5 = arith.truncf %3 : vector<16x128xf32> to vector<16x128xbf16>
    %c0_4 = arith.constant 0 : index
    %c0_5 = arith.constant 0 : index
    %c0_6 = arith.constant 0 : index
    %6 = vector.load %arg3[%c0_4, %c0_5, %c0_6] : memref<1x128x384xbf16, #tpu.memory_space<vmem>>, vector<1x128x384xbf16>
    %7 = vector.shape_cast %6 : vector<1x128x384xbf16> to vector<128x384xbf16>
    %cst = arith.constant dense<0.000000e+00> : vector<16x384xf32>
    %8 = tpu.matmul %5, %7, %cst {dimension_numbers = #tpu.dot_dimension_numbers<[1], [0], [0], [1], [0, 0, 1, 1], [], []>} : vector<16x128xbf16>, vector<128x384xbf16>, vector<16x384xf32> -> vector<16x384xf32>
    %c0_7 = arith.constant 0 : index
    %c0_8 = arith.constant 0 : index
    %c0_9 = arith.constant 0 : index
    %9 = vector.load %arg4[%c0_7, %c0_8, %c0_9] : memref<1x1x384xf32, #tpu.memory_space<vmem>>, vector<1x1x384xf32>
    %10 = vector.shape_cast %9 : vector<1x1x384xf32> to vector<1x384xf32>
    %11 = vector.broadcast %10 : vector<1x384xf32> to vector<16x384xf32>
    %12 = arith.addf %8, %11 : vector<16x384xf32>
    %c0_10 = arith.constant 0 : index
    %c0_11 = arith.constant 0 : index
    %c0_12 = arith.constant 0 : index
    %13 = vector.load %arg5[%c0_10, %c0_11, %c0_12] : memref<1x128x128xbf16, #tpu.memory_space<vmem>>, vector<1x128x128xbf16>
    %14 = vector.shape_cast %13 : vector<1x128x128xbf16> to vector<128x128xbf16>
    %15 = vector.extract_strided_slice %4 {offsets = [0, 0], sizes = [1, 8], strides = [1, 1]} : vector<2x8xf32> to vector<1x8xf32>
    %16 = vector.extract_strided_slice %12 {offsets = [0, 0], sizes = [8, 32], strides = [1, 1]} : vector<16x384xf32> to vector<8x32xf32>
    %17 = arith.truncf %16 : vector<8x32xf32> to vector<8x32xbf16>
    %18 = vector.extract_strided_slice %12 {offsets = [0, 128], sizes = [8, 32], strides = [1, 1]} : vector<16x384xf32> to vector<8x32xf32>
    %19 = arith.truncf %18 : vector<8x32xf32> to vector<8x32xbf16>
    %20 = vector.extract_strided_slice %12 {offsets = [0, 256], sizes = [8, 32], strides = [1, 1]} : vector<16x384xf32> to vector<8x32xf32>
    %21 = arith.truncf %20 : vector<8x32xf32> to vector<8x32xbf16>
    %cst_13 = arith.constant dense<0.000000e+00> : vector<8x8xf32>
    %22 = tpu.matmul %17, %19, %cst_13 {dimension_numbers = #tpu.dot_dimension_numbers<[1], [1], [0], [0], [0, 0, 1, 0], [], []>} : vector<8x32xbf16>, vector<8x32xbf16>, vector<8x8xf32> -> vector<8x8xf32>
    %23 = vector.broadcast %15 : vector<1x8xf32> to vector<8x8xf32>
    %24 = arith.addf %22, %23 : vector<8x8xf32>
    %cst_14 = arith.constant dense<0xFF800000> : vector<8xf32>
    %25 = vector.multi_reduction <maximumf>, %24, %cst_14 [1] : vector<8x8xf32> to vector<8xf32>
    %26 = vector.shape_cast %25 : vector<8xf32> to vector<8x1xf32>
    %27 = vector.broadcast %26 : vector<8x1xf32> to vector<8x8xf32>
    %28 = arith.subf %24, %27 : vector<8x8xf32>
    %29 = math.exp %28 : vector<8x8xf32>
    %cst_15 = arith.constant dense<0.000000e+00> : vector<8xf32>
    %30 = vector.multi_reduction <add>, %29, %cst_15 [1] : vector<8x8xf32> to vector<8xf32>
    %31 = vector.shape_cast %30 : vector<8xf32> to vector<8x1xf32>
    %32 = tpu.reciprocal %31 {approx = true} : vector<8x1xf32> -> vector<8x1xf32>
    %33 = vector.broadcast %32 : vector<8x1xf32> to vector<8x8xf32>
    %34 = arith.mulf %29, %33 : vector<8x8xf32>
    %35 = arith.truncf %34 : vector<8x8xf32> to vector<8x8xbf16>
    %cst_16 = arith.constant dense<0.000000e+00> : vector<8x32xf32>
    %36 = tpu.matmul %35, %21, %cst_16 {dimension_numbers = #tpu.dot_dimension_numbers<[1], [0], [0], [1], [0, 0, 1, 1], [], []>} : vector<8x8xbf16>, vector<8x32xbf16>, vector<8x32xf32> -> vector<8x32xf32>
    %37 = arith.truncf %36 : vector<8x32xf32> to vector<8x32xbf16>
    %38 = vector.extract_strided_slice %14 {offsets = [0, 0], sizes = [32, 128], strides = [1, 1]} : vector<128x128xbf16> to vector<32x128xbf16>
    %cst_17 = arith.constant dense<0.000000e+00> : vector<8x128xf32>
    %39 = tpu.matmul %37, %38, %cst_17 {dimension_numbers = #tpu.dot_dimension_numbers<[1], [0], [0], [1], [0, 0, 1, 1], [], []>} : vector<8x32xbf16>, vector<32x128xbf16>, vector<8x128xf32> -> vector<8x128xf32>
    %40 = vector.extract_strided_slice %12 {offsets = [0, 32], sizes = [8, 32], strides = [1, 1]} : vector<16x384xf32> to vector<8x32xf32>
    %41 = arith.truncf %40 : vector<8x32xf32> to vector<8x32xbf16>
    %42 = vector.extract_strided_slice %12 {offsets = [0, 160], sizes = [8, 32], strides = [1, 1]} : vector<16x384xf32> to vector<8x32xf32>
    %43 = arith.truncf %42 : vector<8x32xf32> to vector<8x32xbf16>
    %44 = vector.extract_strided_slice %12 {offsets = [0, 288], sizes = [8, 32], strides = [1, 1]} : vector<16x384xf32> to vector<8x32xf32>
    %45 = arith.truncf %44 : vector<8x32xf32> to vector<8x32xbf16>
    %cst_18 = arith.constant dense<0.000000e+00> : vector<8x8xf32>
    %46 = tpu.matmul %41, %43, %cst_18 {dimension_numbers = #tpu.dot_dimension_numbers<[1], [1], [0], [0], [0, 0, 1, 0], [], []>} : vector<8x32xbf16>, vector<8x32xbf16>, vector<8x8xf32> -> vector<8x8xf32>
    %47 = vector.broadcast %15 : vector<1x8xf32> to vector<8x8xf32>
    %48 = arith.addf %46, %47 : vector<8x8xf32>
    %cst_19 = arith.constant dense<0xFF800000> : vector<8xf32>
    %49 = vector.multi_reduction <maximumf>, %48, %cst_19 [1] : vector<8x8xf32> to vector<8xf32>
    %50 = vector.shape_cast %49 : vector<8xf32> to vector<8x1xf32>
    %51 = vector.broadcast %50 : vector<8x1xf32> to vector<8x8xf32>
    %52 = arith.subf %48, %51 : vector<8x8xf32>
    %53 = math.exp %52 : vector<8x8xf32>
    %cst_20 = arith.constant dense<0.000000e+00> : vector<8xf32>
    %54 = vector.multi_reduction <add>, %53, %cst_20 [1] : vector<8x8xf32> to vector<8xf32>
    %55 = vector.shape_cast %54 : vector<8xf32> to vector<8x1xf32>
    %56 = tpu.reciprocal %55 {approx = true} : vector<8x1xf32> -> vector<8x1xf32>
    %57 = vector.broadcast %56 : vector<8x1xf32> to vector<8x8xf32>
    %58 = arith.mulf %53, %57 : vector<8x8xf32>
    %59 = arith.truncf %58 : vector<8x8xf32> to vector<8x8xbf16>
    %cst_21 = arith.constant dense<0.000000e+00> : vector<8x32xf32>
    %60 = tpu.matmul %59, %45, %cst_21 {dimension_numbers = #tpu.dot_dimension_numbers<[1], [0], [0], [1], [0, 0, 1, 1], [], []>} : vector<8x8xbf16>, vector<8x32xbf16>, vector<8x32xf32> -> vector<8x32xf32>
    %61 = arith.truncf %60 : vector<8x32xf32> to vector<8x32xbf16>
    %62 = vector.extract_strided_slice %14 {offsets = [32, 0], sizes = [32, 128], strides = [1, 1]} : vector<128x128xbf16> to vector<32x128xbf16>
    %cst_22 = arith.constant dense<0.000000e+00> : vector<8x128xf32>
    %63 = tpu.matmul %61, %62, %cst_22 {dimension_numbers = #tpu.dot_dimension_numbers<[1], [0], [0], [1], [0, 0, 1, 1], [], []>} : vector<8x32xbf16>, vector<32x128xbf16>, vector<8x128xf32> -> vector<8x128xf32>
    %64 = arith.addf %39, %63 : vector<8x128xf32>
    %65 = vector.extract_strided_slice %12 {offsets = [0, 64], sizes = [8, 32], strides = [1, 1]} : vector<16x384xf32> to vector<8x32xf32>
    %66 = arith.truncf %65 : vector<8x32xf32> to vector<8x32xbf16>
    %67 = vector.extract_strided_slice %12 {offsets = [0, 192], sizes = [8, 32], strides = [1, 1]} : vector<16x384xf32> to vector<8x32xf32>
    %68 = arith.truncf %67 : vector<8x32xf32> to vector<8x32xbf16>
    %69 = vector.extract_strided_slice %12 {offsets = [0, 320], sizes = [8, 32], strides = [1, 1]} : vector<16x384xf32> to vector<8x32xf32>
    %70 = arith.truncf %69 : vector<8x32xf32> to vector<8x32xbf16>
    %cst_23 = arith.constant dense<0.000000e+00> : vector<8x8xf32>
    %71 = tpu.matmul %66, %68, %cst_23 {dimension_numbers = #tpu.dot_dimension_numbers<[1], [1], [0], [0], [0, 0, 1, 0], [], []>} : vector<8x32xbf16>, vector<8x32xbf16>, vector<8x8xf32> -> vector<8x8xf32>
    %72 = vector.broadcast %15 : vector<1x8xf32> to vector<8x8xf32>
    %73 = arith.addf %71, %72 : vector<8x8xf32>
    %cst_24 = arith.constant dense<0xFF800000> : vector<8xf32>
    %74 = vector.multi_reduction <maximumf>, %73, %cst_24 [1] : vector<8x8xf32> to vector<8xf32>
    %75 = vector.shape_cast %74 : vector<8xf32> to vector<8x1xf32>
    %76 = vector.broadcast %75 : vector<8x1xf32> to vector<8x8xf32>
    %77 = arith.subf %73, %76 : vector<8x8xf32>
    %78 = math.exp %77 : vector<8x8xf32>
    %cst_25 = arith.constant dense<0.000000e+00> : vector<8xf32>
    %79 = vector.multi_reduction <add>, %78, %cst_25 [1] : vector<8x8xf32> to vector<8xf32>
    %80 = vector.shape_cast %79 : vector<8xf32> to vector<8x1xf32>
    %81 = tpu.reciprocal %80 {approx = true} : vector<8x1xf32> -> vector<8x1xf32>
    %82 = vector.broadcast %81 : vector<8x1xf32> to vector<8x8xf32>
    %83 = arith.mulf %78, %82 : vector<8x8xf32>
    %84 = arith.truncf %83 : vector<8x8xf32> to vector<8x8xbf16>
    %cst_26 = arith.constant dense<0.000000e+00> : vector<8x32xf32>
    %85 = tpu.matmul %84, %70, %cst_26 {dimension_numbers = #tpu.dot_dimension_numbers<[1], [0], [0], [1], [0, 0, 1, 1], [], []>} : vector<8x8xbf16>, vector<8x32xbf16>, vector<8x32xf32> -> vector<8x32xf32>
    %86 = arith.truncf %85 : vector<8x32xf32> to vector<8x32xbf16>
    %87 = vector.extract_strided_slice %14 {offsets = [64, 0], sizes = [32, 128], strides = [1, 1]} : vector<128x128xbf16> to vector<32x128xbf16>
    %cst_27 = arith.constant dense<0.000000e+00> : vector<8x128xf32>
    %88 = tpu.matmul %86, %87, %cst_27 {dimension_numbers = #tpu.dot_dimension_numbers<[1], [0], [0], [1], [0, 0, 1, 1], [], []>} : vector<8x32xbf16>, vector<32x128xbf16>, vector<8x128xf32> -> vector<8x128xf32>
    %89 = arith.addf %64, %88 : vector<8x128xf32>
    %90 = vector.extract_strided_slice %12 {offsets = [0, 96], sizes = [8, 32], strides = [1, 1]} : vector<16x384xf32> to vector<8x32xf32>
    %91 = arith.truncf %90 : vector<8x32xf32> to vector<8x32xbf16>
    %92 = vector.extract_strided_slice %12 {offsets = [0, 224], sizes = [8, 32], strides = [1, 1]} : vector<16x384xf32> to vector<8x32xf32>
    %93 = arith.truncf %92 : vector<8x32xf32> to vector<8x32xbf16>
    %94 = vector.extract_strided_slice %12 {offsets = [0, 352], sizes = [8, 32], strides = [1, 1]} : vector<16x384xf32> to vector<8x32xf32>
    %95 = arith.truncf %94 : vector<8x32xf32> to vector<8x32xbf16>
    %cst_28 = arith.constant dense<0.000000e+00> : vector<8x8xf32>
    %96 = tpu.matmul %91, %93, %cst_28 {dimension_numbers = #tpu.dot_dimension_numbers<[1], [1], [0], [0], [0, 0, 1, 0], [], []>} : vector<8x32xbf16>, vector<8x32xbf16>, vector<8x8xf32> -> vector<8x8xf32>
    %97 = vector.broadcast %15 : vector<1x8xf32> to vector<8x8xf32>
    %98 = arith.addf %96, %97 : vector<8x8xf32>
    %cst_29 = arith.constant dense<0xFF800000> : vector<8xf32>
    %99 = vector.multi_reduction <maximumf>, %98, %cst_29 [1] : vector<8x8xf32> to vector<8xf32>
    %100 = vector.shape_cast %99 : vector<8xf32> to vector<8x1xf32>
    %101 = vector.broadcast %100 : vector<8x1xf32> to vector<8x8xf32>
    %102 = arith.subf %98, %101 : vector<8x8xf32>
    %103 = math.exp %102 : vector<8x8xf32>
    %cst_30 = arith.constant dense<0.000000e+00> : vector<8xf32>
    %104 = vector.multi_reduction <add>, %103, %cst_30 [1] : vector<8x8xf32> to vector<8xf32>
    %105 = vector.shape_cast %104 : vector<8xf32> to vector<8x1xf32>
    %106 = tpu.reciprocal %105 {approx = true} : vector<8x1xf32> -> vector<8x1xf32>
    %107 = vector.broadcast %106 : vector<8x1xf32> to vector<8x8xf32>
    %108 = arith.mulf %103, %107 : vector<8x8xf32>
    %109 = arith.truncf %108 : vector<8x8xf32> to vector<8x8xbf16>
    %cst_31 = arith.constant dense<0.000000e+00> : vector<8x32xf32>
    %110 = tpu.matmul %109, %95, %cst_31 {dimension_numbers = #tpu.dot_dimension_numbers<[1], [0], [0], [1], [0, 0, 1, 1], [], []>} : vector<8x8xbf16>, vector<8x32xbf16>, vector<8x32xf32> -> vector<8x32xf32>
    %111 = arith.truncf %110 : vector<8x32xf32> to vector<8x32xbf16>
    %112 = vector.extract_strided_slice %14 {offsets = [96, 0], sizes = [32, 128], strides = [1, 1]} : vector<128x128xbf16> to vector<32x128xbf16>
    %cst_32 = arith.constant dense<0.000000e+00> : vector<8x128xf32>
    %113 = tpu.matmul %111, %112, %cst_32 {dimension_numbers = #tpu.dot_dimension_numbers<[1], [0], [0], [1], [0, 0, 1, 1], [], []>} : vector<8x32xbf16>, vector<32x128xbf16>, vector<8x128xf32> -> vector<8x128xf32>
    %114 = arith.addf %89, %113 : vector<8x128xf32>
    %115 = tpu.concatenate %34, %58, %83, %108 in 0 : vector<8x8xf32>, vector<8x8xf32>, vector<8x8xf32>, vector<8x8xf32> -> vector<32x8xf32>
    %116 = vector.extract_strided_slice %4 {offsets = [1, 0], sizes = [1, 8], strides = [1, 1]} : vector<2x8xf32> to vector<1x8xf32>
    %117 = vector.extract_strided_slice %12 {offsets = [8, 0], sizes = [8, 32], strides = [1, 1]} : vector<16x384xf32> to vector<8x32xf32>
    %118 = arith.truncf %117 : vector<8x32xf32> to vector<8x32xbf16>
    %119 = vector.extract_strided_slice %12 {offsets = [8, 128], sizes = [8, 32], strides = [1, 1]} : vector<16x384xf32> to vector<8x32xf32>
    %120 = arith.truncf %119 : vector<8x32xf32> to vector<8x32xbf16>
    %121 = vector.extract_strided_slice %12 {offsets = [8, 256], sizes = [8, 32], strides = [1, 1]} : vector<16x384xf32> to vector<8x32xf32>
    %122 = arith.truncf %121 : vector<8x32xf32> to vector<8x32xbf16>
    %cst_33 = arith.constant dense<0.000000e+00> : vector<8x8xf32>
    %123 = tpu.matmul %118, %120, %cst_33 {dimension_numbers = #tpu.dot_dimension_numbers<[1], [1], [0], [0], [0, 0, 1, 0], [], []>} : vector<8x32xbf16>, vector<8x32xbf16>, vector<8x8xf32> -> vector<8x8xf32>
    %124 = vector.broadcast %116 : vector<1x8xf32> to vector<8x8xf32>
    %125 = arith.addf %123, %124 : vector<8x8xf32>
    %cst_34 = arith.constant dense<0xFF800000> : vector<8xf32>
    %126 = vector.multi_reduction <maximumf>, %125, %cst_34 [1] : vector<8x8xf32> to vector<8xf32>
    %127 = vector.shape_cast %126 : vector<8xf32> to vector<8x1xf32>
    %128 = vector.broadcast %127 : vector<8x1xf32> to vector<8x8xf32>
    %129 = arith.subf %125, %128 : vector<8x8xf32>
    %130 = math.exp %129 : vector<8x8xf32>
    %cst_35 = arith.constant dense<0.000000e+00> : vector<8xf32>
    %131 = vector.multi_reduction <add>, %130, %cst_35 [1] : vector<8x8xf32> to vector<8xf32>
    %132 = vector.shape_cast %131 : vector<8xf32> to vector<8x1xf32>
    %133 = tpu.reciprocal %132 {approx = true} : vector<8x1xf32> -> vector<8x1xf32>
    %134 = vector.broadcast %133 : vector<8x1xf32> to vector<8x8xf32>
    %135 = arith.mulf %130, %134 : vector<8x8xf32>
    %136 = arith.truncf %135 : vector<8x8xf32> to vector<8x8xbf16>
    %cst_36 = arith.constant dense<0.000000e+00> : vector<8x32xf32>
    %137 = tpu.matmul %136, %122, %cst_36 {dimension_numbers = #tpu.dot_dimension_numbers<[1], [0], [0], [1], [0, 0, 1, 1], [], []>} : vector<8x8xbf16>, vector<8x32xbf16>, vector<8x32xf32> -> vector<8x32xf32>
    %138 = arith.truncf %137 : vector<8x32xf32> to vector<8x32xbf16>
    %139 = vector.extract_strided_slice %14 {offsets = [0, 0], sizes = [32, 128], strides = [1, 1]} : vector<128x128xbf16> to vector<32x128xbf16>
    %cst_37 = arith.constant dense<0.000000e+00> : vector<8x128xf32>
    %140 = tpu.matmul %138, %139, %cst_37 {dimension_numbers = #tpu.dot_dimension_numbers<[1], [0], [0], [1], [0, 0, 1, 1], [], []>} : vector<8x32xbf16>, vector<32x128xbf16>, vector<8x128xf32> -> vector<8x128xf32>
    %141 = vector.extract_strided_slice %12 {offsets = [8, 32], sizes = [8, 32], strides = [1, 1]} : vector<16x384xf32> to vector<8x32xf32>
    %142 = arith.truncf %141 : vector<8x32xf32> to vector<8x32xbf16>
    %143 = vector.extract_strided_slice %12 {offsets = [8, 160], sizes = [8, 32], strides = [1, 1]} : vector<16x384xf32> to vector<8x32xf32>
    %144 = arith.truncf %143 : vector<8x32xf32> to vector<8x32xbf16>
    %145 = vector.extract_strided_slice %12 {offsets = [8, 288], sizes = [8, 32], strides = [1, 1]} : vector<16x384xf32> to vector<8x32xf32>
    %146 = arith.truncf %145 : vector<8x32xf32> to vector<8x32xbf16>
    %cst_38 = arith.constant dense<0.000000e+00> : vector<8x8xf32>
    %147 = tpu.matmul %142, %144, %cst_38 {dimension_numbers = #tpu.dot_dimension_numbers<[1], [1], [0], [0], [0, 0, 1, 0], [], []>} : vector<8x32xbf16>, vector<8x32xbf16>, vector<8x8xf32> -> vector<8x8xf32>
    %148 = vector.broadcast %116 : vector<1x8xf32> to vector<8x8xf32>
    %149 = arith.addf %147, %148 : vector<8x8xf32>
    %cst_39 = arith.constant dense<0xFF800000> : vector<8xf32>
    %150 = vector.multi_reduction <maximumf>, %149, %cst_39 [1] : vector<8x8xf32> to vector<8xf32>
    %151 = vector.shape_cast %150 : vector<8xf32> to vector<8x1xf32>
    %152 = vector.broadcast %151 : vector<8x1xf32> to vector<8x8xf32>
    %153 = arith.subf %149, %152 : vector<8x8xf32>
    %154 = math.exp %153 : vector<8x8xf32>
    %cst_40 = arith.constant dense<0.000000e+00> : vector<8xf32>
    %155 = vector.multi_reduction <add>, %154, %cst_40 [1] : vector<8x8xf32> to vector<8xf32>
    %156 = vector.shape_cast %155 : vector<8xf32> to vector<8x1xf32>
    %157 = tpu.reciprocal %156 {approx = true} : vector<8x1xf32> -> vector<8x1xf32>
    %158 = vector.broadcast %157 : vector<8x1xf32> to vector<8x8xf32>
    %159 = arith.mulf %154, %158 : vector<8x8xf32>
    %160 = arith.truncf %159 : vector<8x8xf32> to vector<8x8xbf16>
    %cst_41 = arith.constant dense<0.000000e+00> : vector<8x32xf32>
    %161 = tpu.matmul %160, %146, %cst_41 {dimension_numbers = #tpu.dot_dimension_numbers<[1], [0], [0], [1], [0, 0, 1, 1], [], []>} : vector<8x8xbf16>, vector<8x32xbf16>, vector<8x32xf32> -> vector<8x32xf32>
    %162 = arith.truncf %161 : vector<8x32xf32> to vector<8x32xbf16>
    %163 = vector.extract_strided_slice %14 {offsets = [32, 0], sizes = [32, 128], strides = [1, 1]} : vector<128x128xbf16> to vector<32x128xbf16>
    %cst_42 = arith.constant dense<0.000000e+00> : vector<8x128xf32>
    %164 = tpu.matmul %162, %163, %cst_42 {dimension_numbers = #tpu.dot_dimension_numbers<[1], [0], [0], [1], [0, 0, 1, 1], [], []>} : vector<8x32xbf16>, vector<32x128xbf16>, vector<8x128xf32> -> vector<8x128xf32>
    %165 = arith.addf %140, %164 : vector<8x128xf32>
    %166 = vector.extract_strided_slice %12 {offsets = [8, 64], sizes = [8, 32], strides = [1, 1]} : vector<16x384xf32> to vector<8x32xf32>
    %167 = arith.truncf %166 : vector<8x32xf32> to vector<8x32xbf16>
    %168 = vector.extract_strided_slice %12 {offsets = [8, 192], sizes = [8, 32], strides = [1, 1]} : vector<16x384xf32> to vector<8x32xf32>
    %169 = arith.truncf %168 : vector<8x32xf32> to vector<8x32xbf16>
    %170 = vector.extract_strided_slice %12 {offsets = [8, 320], sizes = [8, 32], strides = [1, 1]} : vector<16x384xf32> to vector<8x32xf32>
    %171 = arith.truncf %170 : vector<8x32xf32> to vector<8x32xbf16>
    %cst_43 = arith.constant dense<0.000000e+00> : vector<8x8xf32>
    %172 = tpu.matmul %167, %169, %cst_43 {dimension_numbers = #tpu.dot_dimension_numbers<[1], [1], [0], [0], [0, 0, 1, 0], [], []>} : vector<8x32xbf16>, vector<8x32xbf16>, vector<8x8xf32> -> vector<8x8xf32>
    %173 = vector.broadcast %116 : vector<1x8xf32> to vector<8x8xf32>
    %174 = arith.addf %172, %173 : vector<8x8xf32>
    %cst_44 = arith.constant dense<0xFF800000> : vector<8xf32>
    %175 = vector.multi_reduction <maximumf>, %174, %cst_44 [1] : vector<8x8xf32> to vector<8xf32>
    %176 = vector.shape_cast %175 : vector<8xf32> to vector<8x1xf32>
    %177 = vector.broadcast %176 : vector<8x1xf32> to vector<8x8xf32>
    %178 = arith.subf %174, %177 : vector<8x8xf32>
    %179 = math.exp %178 : vector<8x8xf32>
    %cst_45 = arith.constant dense<0.000000e+00> : vector<8xf32>
    %180 = vector.multi_reduction <add>, %179, %cst_45 [1] : vector<8x8xf32> to vector<8xf32>
    %181 = vector.shape_cast %180 : vector<8xf32> to vector<8x1xf32>
    %182 = tpu.reciprocal %181 {approx = true} : vector<8x1xf32> -> vector<8x1xf32>
    %183 = vector.broadcast %182 : vector<8x1xf32> to vector<8x8xf32>
    %184 = arith.mulf %179, %183 : vector<8x8xf32>
    %185 = arith.truncf %184 : vector<8x8xf32> to vector<8x8xbf16>
    %cst_46 = arith.constant dense<0.000000e+00> : vector<8x32xf32>
    %186 = tpu.matmul %185, %171, %cst_46 {dimension_numbers = #tpu.dot_dimension_numbers<[1], [0], [0], [1], [0, 0, 1, 1], [], []>} : vector<8x8xbf16>, vector<8x32xbf16>, vector<8x32xf32> -> vector<8x32xf32>
    %187 = arith.truncf %186 : vector<8x32xf32> to vector<8x32xbf16>
    %188 = vector.extract_strided_slice %14 {offsets = [64, 0], sizes = [32, 128], strides = [1, 1]} : vector<128x128xbf16> to vector<32x128xbf16>
    %cst_47 = arith.constant dense<0.000000e+00> : vector<8x128xf32>
    %189 = tpu.matmul %187, %188, %cst_47 {dimension_numbers = #tpu.dot_dimension_numbers<[1], [0], [0], [1], [0, 0, 1, 1], [], []>} : vector<8x32xbf16>, vector<32x128xbf16>, vector<8x128xf32> -> vector<8x128xf32>
    %190 = arith.addf %165, %189 : vector<8x128xf32>
    %191 = vector.extract_strided_slice %12 {offsets = [8, 96], sizes = [8, 32], strides = [1, 1]} : vector<16x384xf32> to vector<8x32xf32>
    %192 = arith.truncf %191 : vector<8x32xf32> to vector<8x32xbf16>
    %193 = vector.extract_strided_slice %12 {offsets = [8, 224], sizes = [8, 32], strides = [1, 1]} : vector<16x384xf32> to vector<8x32xf32>
    %194 = arith.truncf %193 : vector<8x32xf32> to vector<8x32xbf16>
    %195 = vector.extract_strided_slice %12 {offsets = [8, 352], sizes = [8, 32], strides = [1, 1]} : vector<16x384xf32> to vector<8x32xf32>
    %196 = arith.truncf %195 : vector<8x32xf32> to vector<8x32xbf16>
    %cst_48 = arith.constant dense<0.000000e+00> : vector<8x8xf32>
    %197 = tpu.matmul %192, %194, %cst_48 {dimension_numbers = #tpu.dot_dimension_numbers<[1], [1], [0], [0], [0, 0, 1, 0], [], []>} : vector<8x32xbf16>, vector<8x32xbf16>, vector<8x8xf32> -> vector<8x8xf32>
    %198 = vector.broadcast %116 : vector<1x8xf32> to vector<8x8xf32>
    %199 = arith.addf %197, %198 : vector<8x8xf32>
    %cst_49 = arith.constant dense<0xFF800000> : vector<8xf32>
    %200 = vector.multi_reduction <maximumf>, %199, %cst_49 [1] : vector<8x8xf32> to vector<8xf32>
    %201 = vector.shape_cast %200 : vector<8xf32> to vector<8x1xf32>
    %202 = vector.broadcast %201 : vector<8x1xf32> to vector<8x8xf32>
    %203 = arith.subf %199, %202 : vector<8x8xf32>
    %204 = math.exp %203 : vector<8x8xf32>
    %cst_50 = arith.constant dense<0.000000e+00> : vector<8xf32>
    %205 = vector.multi_reduction <add>, %204, %cst_50 [1] : vector<8x8xf32> to vector<8xf32>
    %206 = vector.shape_cast %205 : vector<8xf32> to vector<8x1xf32>
    %207 = tpu.reciprocal %206 {approx = true} : vector<8x1xf32> -> vector<8x1xf32>
    %208 = vector.broadcast %207 : vector<8x1xf32> to vector<8x8xf32>
    %209 = arith.mulf %204, %208 : vector<8x8xf32>
    %210 = arith.truncf %209 : vector<8x8xf32> to vector<8x8xbf16>
    %cst_51 = arith.constant dense<0.000000e+00> : vector<8x32xf32>
    %211 = tpu.matmul %210, %196, %cst_51 {dimension_numbers = #tpu.dot_dimension_numbers<[1], [0], [0], [1], [0, 0, 1, 1], [], []>} : vector<8x8xbf16>, vector<8x32xbf16>, vector<8x32xf32> -> vector<8x32xf32>
    %212 = arith.truncf %211 : vector<8x32xf32> to vector<8x32xbf16>
    %213 = vector.extract_strided_slice %14 {offsets = [96, 0], sizes = [32, 128], strides = [1, 1]} : vector<128x128xbf16> to vector<32x128xbf16>
    %cst_52 = arith.constant dense<0.000000e+00> : vector<8x128xf32>
    %214 = tpu.matmul %212, %213, %cst_52 {dimension_numbers = #tpu.dot_dimension_numbers<[1], [0], [0], [1], [0, 0, 1, 1], [], []>} : vector<8x32xbf16>, vector<32x128xbf16>, vector<8x128xf32> -> vector<8x128xf32>
    %215 = arith.addf %190, %214 : vector<8x128xf32>
    %216 = tpu.concatenate %135, %159, %184, %209 in 0 : vector<8x8xf32>, vector<8x8xf32>, vector<8x8xf32>, vector<8x8xf32> -> vector<32x8xf32>
    %217 = tpu.concatenate %115, %216 in 0 : vector<32x8xf32>, vector<32x8xf32> -> vector<64x8xf32>
    %c0_53 = arith.constant 0 : index
    %c0_54 = arith.constant 0 : index
    %c0_55 = arith.constant 0 : index
    %218 = vector.load %arg16[%c0_53, %c0_54, %c0_55] : memref<1x64x8xf32, #tpu.memory_space<vmem>>, vector<1x64x8xf32>
    %219 = vector.shape_cast %218 : vector<1x64x8xf32> to vector<64x8xf32>
    %220 = vector.shape_cast %217 : vector<64x8xf32> to vector<1x64x8xf32>
    tpu.vector_store %arg16[%c0_53, %c0_54, %c0_55], %220 {strides = array<i32>} : memref<1x64x8xf32, #tpu.memory_space<vmem>>, vector<1x64x8xf32>,
    %221 = tpu.concatenate %114, %215 in 0 : vector<8x128xf32>, vector<8x128xf32> -> vector<16x128xf32>
    %c0_56 = arith.constant 0 : index
    %c0_57 = arith.constant 0 : index
    %c0_58 = arith.constant 0 : index
    %222 = vector.load %arg6[%c0_56, %c0_57, %c0_58] : memref<1x1x128xf32, #tpu.memory_space<vmem>>, vector<1x1x128xf32>
    %223 = vector.shape_cast %222 : vector<1x1x128xf32> to vector<1x128xf32>
    %224 = vector.broadcast %223 : vector<1x128xf32> to vector<16x128xf32>
    %225 = arith.addf %221, %224 : vector<16x128xf32>
    %226 = arith.addf %225, %3 : vector<16x128xf32>
    %c0_59 = arith.constant 0 : index
    %c0_60 = arith.constant 0 : index
    %c0_61 = arith.constant 0 : index
    %227 = vector.load %arg7[%c0_59, %c0_60, %c0_61] : memref<1x1x128xf32, #tpu.memory_space<vmem>>, vector<1x1x128xf32>
    %228 = vector.shape_cast %227 : vector<1x1x128xf32> to vector<1x128xf32>
    %c0_62 = arith.constant 0 : index
    %c0_63 = arith.constant 0 : index
    %c0_64 = arith.constant 0 : index
    %229 = vector.load %arg8[%c0_62, %c0_63, %c0_64] : memref<1x1x128xf32, #tpu.memory_space<vmem>>, vector<1x1x128xf32>
    %230 = vector.shape_cast %229 : vector<1x1x128xf32> to vector<1x128xf32>
    %cst_65 = arith.constant dense<0.000000e+00> : vector<16xf32>
    %231 = vector.multi_reduction <add>, %226, %cst_65 [1] : vector<16x128xf32> to vector<16xf32>
    %232 = vector.shape_cast %231 : vector<16xf32> to vector<16x1xf32>
    %cst_66 = arith.constant 1.280000e+02 : f32
    %233 = vector.broadcast %cst_66 : f32 to vector<16x1xf32>
    %234 = arith.divf %232, %233 : vector<16x1xf32>
    %235 = vector.broadcast %234 : vector<16x1xf32> to vector<16x128xf32>
    %236 = arith.subf %226, %235 : vector<16x128xf32>
    %237 = arith.mulf %236, %236 : vector<16x128xf32>
    %cst_67 = arith.constant dense<0.000000e+00> : vector<16xf32>
    %238 = vector.multi_reduction <add>, %237, %cst_67 [1] : vector<16x128xf32> to vector<16xf32>
    %239 = vector.shape_cast %238 : vector<16xf32> to vector<16x1xf32>
    %cst_68 = arith.constant 1.280000e+02 : f32
    %240 = vector.broadcast %cst_68 : f32 to vector<16x1xf32>
    %241 = arith.divf %239, %240 : vector<16x1xf32>
    %242 = vector.broadcast %234 : vector<16x1xf32> to vector<16x128xf32>
    %243 = arith.subf %226, %242 : vector<16x128xf32>
    %cst_69 = arith.constant 9.99999974E-6 : f32
    %244 = vector.broadcast %cst_69 : f32 to vector<16x1xf32>
    %245 = arith.addf %241, %244 : vector<16x1xf32>
    %246 = math.rsqrt %245 : vector<16x1xf32>
    %247 = vector.broadcast %246 : vector<16x1xf32> to vector<16x128xf32>
    %248 = arith.mulf %243, %247 : vector<16x128xf32>
    %249 = vector.broadcast %228 : vector<1x128xf32> to vector<16x128xf32>
    %250 = arith.mulf %248, %249 : vector<16x128xf32>
    %251 = vector.broadcast %230 : vector<1x128xf32> to vector<16x128xf32>
    %252 = arith.addf %250, %251 : vector<16x128xf32>
    %253 = arith.truncf %252 : vector<16x128xf32> to vector<16x128xbf16>
    %c0_70 = arith.constant 0 : index
    %c0_71 = arith.constant 0 : index
    %c0_72 = arith.constant 0 : index
    %254 = vector.load %arg9[%c0_70, %c0_71, %c0_72] : memref<1x128x256xbf16, #tpu.memory_space<vmem>>, vector<1x128x256xbf16>
    %255 = vector.shape_cast %254 : vector<1x128x256xbf16> to vector<128x256xbf16>
    %cst_73 = arith.constant dense<0.000000e+00> : vector<16x256xf32>
    %256 = tpu.matmul %253, %255, %cst_73 {dimension_numbers = #tpu.dot_dimension_numbers<[1], [0], [0], [1], [0, 0, 1, 1], [], []>} : vector<16x128xbf16>, vector<128x256xbf16>, vector<16x256xf32> -> vector<16x256xf32>
    %c0_74 = arith.constant 0 : index
    %c0_75 = arith.constant 0 : index
    %c0_76 = arith.constant 0 : index
    %257 = vector.load %arg10[%c0_74, %c0_75, %c0_76] : memref<1x1x256xf32, #tpu.memory_space<vmem>>, vector<1x1x256xf32>
    %258 = vector.shape_cast %257 : vector<1x1x256xf32> to vector<1x256xf32>
    %259 = vector.broadcast %258 : vector<1x256xf32> to vector<16x256xf32>
    %260 = arith.addf %256, %259 : vector<16x256xf32>
    %cst_77 = arith.constant 0.000000e+00 : f32
    %261 = vector.broadcast %cst_77 : f32 to vector<16x256xf32>
    %262 = arith.maximumf %260, %261 : vector<16x256xf32>
    %263 = arith.truncf %262 : vector<16x256xf32> to vector<16x256xbf16>
    %c0_78 = arith.constant 0 : index
    %c0_79 = arith.constant 0 : index
    %c0_80 = arith.constant 0 : index
    %264 = vector.load %arg11[%c0_78, %c0_79, %c0_80] : memref<1x256x128xbf16, #tpu.memory_space<vmem>>, vector<1x256x128xbf16>
    %265 = vector.shape_cast %264 : vector<1x256x128xbf16> to vector<256x128xbf16>
    %cst_81 = arith.constant dense<0.000000e+00> : vector<16x128xf32>
    %266 = tpu.matmul %263, %265, %cst_81 {dimension_numbers = #tpu.dot_dimension_numbers<[1], [0], [0], [1], [0, 0, 1, 1], [], []>} : vector<16x256xbf16>, vector<256x128xbf16>, vector<16x128xf32> -> vector<16x128xf32>
    %c0_82 = arith.constant 0 : index
    %c0_83 = arith.constant 0 : index
    %c0_84 = arith.constant 0 : index
    %267 = vector.load %arg12[%c0_82, %c0_83, %c0_84] : memref<1x1x128xf32, #tpu.memory_space<vmem>>, vector<1x1x128xf32>
    %268 = vector.shape_cast %267 : vector<1x1x128xf32> to vector<1x128xf32>
    %269 = vector.broadcast %268 : vector<1x128xf32> to vector<16x128xf32>
    %270 = arith.addf %266, %269 : vector<16x128xf32>
    %271 = arith.addf %270, %252 : vector<16x128xf32>
    %c0_85 = arith.constant 0 : index
    %c0_86 = arith.constant 0 : index
    %c0_87 = arith.constant 0 : index
    %272 = vector.load %arg13[%c0_85, %c0_86, %c0_87] : memref<1x1x128xf32, #tpu.memory_space<vmem>>, vector<1x1x128xf32>
    %273 = vector.shape_cast %272 : vector<1x1x128xf32> to vector<1x128xf32>
    %c0_88 = arith.constant 0 : index
    %c0_89 = arith.constant 0 : index
    %c0_90 = arith.constant 0 : index
    %274 = vector.load %arg14[%c0_88, %c0_89, %c0_90] : memref<1x1x128xf32, #tpu.memory_space<vmem>>, vector<1x1x128xf32>
    %275 = vector.shape_cast %274 : vector<1x1x128xf32> to vector<1x128xf32>
    %cst_91 = arith.constant dense<0.000000e+00> : vector<16xf32>
    %276 = vector.multi_reduction <add>, %271, %cst_91 [1] : vector<16x128xf32> to vector<16xf32>
    %277 = vector.shape_cast %276 : vector<16xf32> to vector<16x1xf32>
    %cst_92 = arith.constant 1.280000e+02 : f32
    %278 = vector.broadcast %cst_92 : f32 to vector<16x1xf32>
    %279 = arith.divf %277, %278 : vector<16x1xf32>
    %280 = vector.broadcast %279 : vector<16x1xf32> to vector<16x128xf32>
    %281 = arith.subf %271, %280 : vector<16x128xf32>
    %282 = arith.mulf %281, %281 : vector<16x128xf32>
    %cst_93 = arith.constant dense<0.000000e+00> : vector<16xf32>
    %283 = vector.multi_reduction <add>, %282, %cst_93 [1] : vector<16x128xf32> to vector<16xf32>
    %284 = vector.shape_cast %283 : vector<16xf32> to vector<16x1xf32>
    %cst_94 = arith.constant 1.280000e+02 : f32
    %285 = vector.broadcast %cst_94 : f32 to vector<16x1xf32>
    %286 = arith.divf %284, %285 : vector<16x1xf32>
    %287 = vector.broadcast %279 : vector<16x1xf32> to vector<16x128xf32>
    %288 = arith.subf %271, %287 : vector<16x128xf32>
    %cst_95 = arith.constant 9.99999974E-6 : f32
    %289 = vector.broadcast %cst_95 : f32 to vector<16x1xf32>
    %290 = arith.addf %286, %289 : vector<16x1xf32>
    %291 = math.rsqrt %290 : vector<16x1xf32>
    %292 = vector.broadcast %291 : vector<16x1xf32> to vector<16x128xf32>
    %293 = arith.mulf %288, %292 : vector<16x128xf32>
    %294 = vector.broadcast %273 : vector<1x128xf32> to vector<16x128xf32>
    %295 = arith.mulf %293, %294 : vector<16x128xf32>
    %296 = vector.broadcast %275 : vector<1x128xf32> to vector<16x128xf32>
    %297 = arith.addf %295, %296 : vector<16x128xf32>
    %c0_96 = arith.constant 0 : index
    %c0_97 = arith.constant 0 : index
    %298 = vector.load %arg15[%c0_96, %c0_97] : memref<16x128xf32, #tpu.memory_space<vmem>>, vector<16x128xf32>
    tpu.vector_store %arg15[%c0_96, %c0_97], %297 {strides = array<i32>} : memref<16x128xf32, #tpu.memory_space<vmem>>, vector<16x128xf32>,
    return
  }
  func.func @transform_0(%arg0: i32) -> (i32, i32) {
    %c0_i32 = arith.constant 0 : i32
    %c0_i32_0 = arith.constant 0 : i32
    %c0_i32_1 = arith.constant 0 : i32
    return %c0_i32, %c0_i32_0 : i32, i32
  }
  func.func @transform_1(%arg0: i32) -> (i32, i32) {
    %c0_i32 = arith.constant 0 : i32
    %c0_i32_0 = arith.constant 0 : i32
    %c0_i32_1 = arith.constant 0 : i32
    return %c0_i32, %c0_i32_0 : i32, i32
  }
  func.func @transform_2(%arg0: i32) -> (i32, i32, i32) {
    %c0_i32 = arith.constant 0 : i32
    %c0_i32_0 = arith.constant 0 : i32
    %c0_i32_1 = arith.constant 0 : i32
    return %arg0, %c0_i32, %c0_i32_0 : i32, i32, i32
  }
  func.func @transform_3(%arg0: i32) -> (i32, i32, i32) {
    %c0_i32 = arith.constant 0 : i32
    %c0_i32_0 = arith.constant 0 : i32
    %c0_i32_1 = arith.constant 0 : i32
    return %arg0, %c0_i32, %c0_i32_0 : i32, i32, i32
  }
  func.func @transform_4(%arg0: i32) -> (i32, i32, i32) {
    %c0_i32 = arith.constant 0 : i32
    %c0_i32_0 = arith.constant 0 : i32
    %c0_i32_1 = arith.constant 0 : i32
    return %arg0, %c0_i32, %c0_i32_0 : i32, i32, i32
  }
  func.func @transform_5(%arg0: i32) -> (i32, i32, i32) {
    %c0_i32 = arith.constant 0 : i32
    %c0_i32_0 = arith.constant 0 : i32
    %c0_i32_1 = arith.constant 0 : i32
    return %arg0, %c0_i32, %c0_i32_0 : i32, i32, i32
  }
  func.func @transform_6(%arg0: i32) -> (i32, i32, i32) {
    %c0_i32 = arith.constant 0 : i32
    %c0_i32_0 = arith.constant 0 : i32
    %c0_i32_1 = arith.constant 0 : i32
    return %arg0, %c0_i32, %c0_i32_0 : i32, i32, i32
  }
  func.func @transform_7(%arg0: i32) -> (i32, i32, i32) {
    %c0_i32 = arith.constant 0 : i32
    %c0_i32_0 = arith.constant 0 : i32
    %c0_i32_1 = arith.constant 0 : i32
    return %arg0, %c0_i32, %c0_i32_0 : i32, i32, i32
  }
  func.func @transform_8(%arg0: i32) -> (i32, i32, i32) {
    %c0_i32 = arith.constant 0 : i32
    %c0_i32_0 = arith.constant 0 : i32
    %c0_i32_1 = arith.constant 0 : i32
    return %arg0, %c0_i32, %c0_i32_0 : i32, i32, i32
  }
  func.func @transform_9(%arg0: i32) -> (i32, i32, i32) {
    %c0_i32 = arith.constant 0 : i32
    %c0_i32_0 = arith.constant 0 : i32
    %c0_i32_1 = arith.constant 0 : i32
    return %arg0, %c0_i32, %c0_i32_0 : i32, i32, i32
  }
  func.func @transform_10(%arg0: i32) -> (i32, i32, i32) {
    %c0_i32 = arith.constant 0 : i32
    %c0_i32_0 = arith.constant 0 : i32
    %c0_i32_1 = arith.constant 0 : i32
    return %arg0, %c0_i32, %c0_i32_0 : i32, i32, i32
  }
  func.func @transform_11(%arg0: i32) -> (i32, i32, i32) {
    %c0_i32 = arith.constant 0 : i32
    %c0_i32_0 = arith.constant 0 : i32
    %c0_i32_1 = arith.constant 0 : i32
    return %arg0, %c0_i32, %c0_i32_0 : i32, i32, i32
  }
  func.func @transform_12(%arg0: i32) -> (i32, i32, i32) {
    %c0_i32 = arith.constant 0 : i32
    %c0_i32_0 = arith.constant 0 : i32
    %c0_i32_1 = arith.constant 0 : i32
    return %arg0, %c0_i32, %c0_i32_0 : i32, i32, i32
  }
  func.func @transform_13(%arg0: i32) -> (i32, i32, i32) {
    %c0_i32 = arith.constant 0 : i32
    %c0_i32_0 = arith.constant 0 : i32
    %c0_i32_1 = arith.constant 0 : i32
    return %arg0, %c0_i32, %c0_i32_0 : i32, i32, i32
  }
  func.func @transform_14(%arg0: i32) -> (i32, i32) {
    %c0_i32 = arith.constant 0 : i32
    %c0_i32_0 = arith.constant 0 : i32
    %c0_i32_1 = arith.constant 0 : i32
    return %c0_i32, %c0_i32_0 : i32, i32
  }
  func.func @transform_15(%arg0: i32) -> (i32, i32, i32) {
    %c0_i32 = arith.constant 0 : i32
    %c0_i32_0 = arith.constant 0 : i32
    %c0_i32_1 = arith.constant 0 : i32
    return %arg0, %c0_i32, %c0_i32_0 : i32, i32, i32
  }
}

</mosaic_0001>

<llo_original>
// kernel: _lambda_.1
$region0: #{_lambda_.1}
  #allocation0 [shape = 'u32[]', space=smem, size = 0x4, offset = 0x4, fixed_abs, tag = 'smem constant byte address 0x4 - core index']
  #allocation1 [shape = 'u32[72,128]{1,0:T(1,128)}', space=vmem, size = 0x9000, scoped, tag = 'internal scratch']
  %s0 = inlined_call_operand.vmem [shape: f32[16,128], index: 0, kind: input, shape index: {}]
  %s1 = inlined_call_operand.vmem [shape: f32[2,8], index: 1, kind: input, shape index: {}]
  %s2 = inlined_call_operand.hbm [shape: bf16[2,128,384], index: 2, kind: input, shape index: {}]
  %s3 = inlined_call_operand.vmem [shape: f32[2,1,384], index: 3, kind: input, shape index: {}]
  %s4 = inlined_call_operand.vmem [shape: bf16[2,128,128], index: 4, kind: input, shape index: {}]
  %s5 = inlined_call_operand.vmem [shape: f32[2,1,128], index: 5, kind: input, shape index: {}]
  %s6 = inlined_call_operand.vmem [shape: f32[2,1,128], index: 6, kind: input, shape index: {}]
  %s7 = inlined_call_operand.vmem [shape: f32[2,1,128], index: 7, kind: input, shape index: {}]
  %s8 = inlined_call_operand.hbm [shape: bf16[2,128,256], index: 8, kind: input, shape index: {}]
  %s9 = inlined_call_operand.vmem [shape: f32[2,1,256], index: 9, kind: input, shape index: {}]
  %s10 = inlined_call_operand.hbm [shape: bf16[2,256,128], index: 10, kind: input, shape index: {}]
  %s11 = inlined_call_operand.vmem [shape: f32[2,1,128], index: 11, kind: input, shape index: {}]
  %s12 = inlined_call_operand.vmem [shape: f32[2,1,128], index: 12, kind: input, shape index: {}]
  %s13 = inlined_call_operand.vmem [shape: f32[2,1,128], index: 13, kind: input, shape index: {}]
  %s14 = inlined_call_operand.hbm [shape: f32[16,128], index: 14, kind: output, shape index: {0}]
  %s15 = inlined_call_operand.vmem [shape: f32[2,64,8], index: 15, kind: output, shape index: {1}]
  %16 = xla_tuple %s14, %s15
  %s17 = sld [smem:[#allocation0]]
  $region113: #{_lambda_.1} parent=0
    _
  %s19 = ssub.s32 1, %s17
  %s20 = scalar_select 0, %s19, %s17
  $region1: #{_lambda_.1} parent=0
    #allocation2 [shape = 'u8[196608]{0}', space=vmem, size = 0x30000, scoped, tag = 'input window, operand 2']
    #allocation3 [shape = 's32[2]{0}', space=sflag, size = 0x8, scoped, tag = 'scoped memory for _lambda_.1']
    #allocation4 [shape = 's32[2]{0}', space=sflag, size = 0x8, scoped, tag = 'scoped memory for _lambda_.1']
    #allocation5 [shape = 'u8[131072]{0}', space=vmem, size = 0x20000, scoped, tag = 'input window, operand 8']
    #allocation6 [shape = 's32[2]{0}', space=sflag, size = 0x8, scoped, tag = 'scoped memory for _lambda_.1']
    #allocation7 [shape = 'u8[131072]{0}', space=vmem, size = 0x20000, scoped, tag = 'input window, operand 10']
    #allocation8 [shape = 'u8[8192]{0}', space=vmem, size = 0x2000, scoped, tag = 'output window, operand 0, single buffered']
    %21 = vsyncpa [#allocation3], 0
    %s22 = scalar_lea.sflag [#allocation3], 1
    %23 = vsyncpa %s22, 0
    %24 = vsyncpa [#allocation6], 0
    %s25 = scalar_lea.sflag [#allocation6], 1
    %26 = vsyncpa %s25, 0
    %27 = vsyncpa [#allocation4], 0
    loop: start=0, step=1, limit=4
    $region2: #{_lambda_.1} parent=1 // loop_pre_header
      _
    $region3: #{_lambda_.1} parent=1 // loop_header
      %s29 = sphi 0, %s33
      %p30 = scmp.ge.s32.totalorder %s29, 4
      %s37 = sphi 0, %s37
      %s39 = sphi 0, %s37
      %s40 = sphi 0, %s39
      %s54 = sphi 0, %s40
      %s58 = sphi 0, %s58
      %s60 = sphi 0, %s58
      %s61 = sphi 0, %s60
      %s75 = sphi 0, %s61
      %s81 = sphi 0, %s83
      %s84 = sphi 0, %s81
      %s85 = sphi 0, %s84
      %s101 = sphi 0, %s85
      %s107 = sphi 0, %s109
      %s110 = sphi 0, %s107
      %s111 = sphi 0, %s110
      %s127 = sphi 0, %s111
      %s133 = sphi 0, %s135
      %s136 = sphi 0, %s133
      %s137 = sphi 0, %s136
      %s153 = sphi 0, %s137
      %s159 = sphi 0, %s161
      %s162 = sphi 0, %s159
      %s163 = sphi 0, %s162
      %s179 = sphi 0, %s163
      %s185 = sphi 0, %s187
      %s188 = sphi 0, %s185
      %s189 = sphi 0, %s188
      %s205 = sphi 0, %s189
      %s211 = sphi 0, %s213
      %s214 = sphi 0, %s211
      %s215 = sphi 0, %s214
      %s231 = sphi 0, %s215
      %s237 = sphi 0, %s239
      %s240 = sphi 0, %s237
      %s241 = sphi 0, %s240
      %s257 = sphi 0, %s241
      %s263 = sphi 0, %s265
      %s266 = sphi 0, %s263
      %s267 = sphi 0, %s266
      %s283 = sphi 0, %s267
      %s289 = sphi 0, %s291
      %s292 = sphi 0, %s289
      %s293 = sphi 0, %s292
      %s309 = sphi 0, %s293
      %s315 = sphi 0, %s317
      %s318 = sphi 0, %s315
      %s319 = sphi 0, %s318
      %s335 = sphi 0, %s319
      %s341 = sphi 0, %s343
      %s344 = sphi 0, %s341
      %s345 = sphi 0, %s344
      %s361 = sphi 0, %s345
      %s367 = sphi 0, %s369
      %s370 = sphi 0, %s367
      %s371 = sphi 0, %s370
      %s387 = sphi 0, %s371
      %s391 = sphi 0, %s391
      %s393 = sphi 0, %s391
      %s394 = sphi 0, %s393
      %s408 = sphi 0, %s394
      %s414 = sphi 0, %s416
      %s417 = sphi 0, %s414
      %s418 = sphi 0, %s417
      %s434 = sphi 0, %s418
    $region4: #{_lambda_.1} parent=1 // loop_header_branch
      %32 = sbr.rel (%p30) target = $region8
    $region5: #{_lambda_.1} parent=1 // loop_body
      %s34 = ssub.s32 %s29, 1
      %s35 = ssub.s32 %s29, 2
      %s36 = sadd.s32 %s29, 1
      %s38 = sadd.s32 %s37, 1
      %p41 = scmp.eq.s32.totalorder %s29, 1
      %p42 = scmp.ne.s32.totalorder %s37, %s39
      %p43 = scmp.eq.s32.totalorder %s29, 0
      %p44 = por %p42, %p43
      %p45 = scmp.ne.s32.totalorder %s37, %s39
      %p46 = scmp.eq.s32.totalorder %s34, 1
      %p47 = por %p45, %p46
      %p48 = scmp.ne.s32.totalorder %s39, %s40
      %p49 = scmp.eq.s32.totalorder %s34, 0
      %p50 = por %p48, %p49
      %p51 = scmp.ne.s32.totalorder %s39, %s40
      %p52 = scmp.eq.s32.totalorder %s35, 1
      %p53 = por %p51, %p52
      %p55 = scmp.ne.s32.totalorder %s40, %s54
      %p56 = scmp.eq.s32.totalorder %s35, 0
      %p57 = por %p55, %p56
      %s59 = sadd.s32 %s58, 1
      %p62 = scmp.eq.s32.totalorder %s29, 1
      %p63 = scmp.ne.s32.totalorder %s58, %s60
      %p64 = scmp.eq.s32.totalorder %s29, 0
      %p65 = por %p63, %p64
      %p66 = scmp.ne.s32.totalorder %s58, %s60
      %p67 = scmp.eq.s32.totalorder %s34, 1
      %p68 = por %p66, %p67
      %p69 = scmp.ne.s32.totalorder %s60, %s61
      %p70 = scmp.eq.s32.totalorder %s34, 0
      %p71 = por %p69, %p70
      %p72 = scmp.ne.s32.totalorder %s60, %s61
      %p73 = scmp.eq.s32.totalorder %s35, 1
      %p74 = por %p72, %p73
      %p76 = scmp.ne.s32.totalorder %s61, %s75
      %p77 = scmp.eq.s32.totalorder %s35, 0
      %p78 = por %p76, %p77
      %s79 = ssub.s32 %s29, %s36
      %p80 = scmp.eq.s32.totalorder %s79, 0
      %s82 = sadd.s32 %s81, 1
      %s83 = scalar_select %p80, %s81, %s82
      %p86 = pneg %p80
      %p87 = scmp.eq.s32.totalorder %s29, 1
      %p88 = por %p86, %p87
      %p89 = scmp.ne.s32.totalorder %s81, %s84
      %p90 = scmp.eq.s32.totalorder %s29, 0
      %p91 = por %p89, %p90
      %p92 = scmp.ne.s32.totalorder %s81, %s84
      %p93 = scmp.eq.s32.totalorder %s34, 1
      %p94 = por %p92, %p93
      %p95 = scmp.ne.s32.totalorder %s84, %s85
      %p96 = scmp.eq.s32.totalorder %s34, 0
      %p97 = por %p95, %p96
      %p98 = scmp.ne.s32.totalorder %s84, %s85
      %p99 = scmp.eq.s32.totalorder %s35, 1
      %p100 = por %p98, %p99
      %p102 = scmp.ne.s32.totalorder %s85, %s101
      %p103 = scmp.eq.s32.totalorder %s35, 0
      %p104 = por %p102, %p103
      %s105 = ssub.s32 %s29, %s36
      %p106 = scmp.eq.s32.totalorder %s105, 0
      %s108 = sadd.s32 %s107, 1
      %s109 = scalar_select %p106, %s107, %s108
      %p112 = pneg %p106
      %p113 = scmp.eq.s32.totalorder %s29, 1
      %p114 = por %p112, %p113
      %p115 = scmp.ne.s32.totalorder %s107, %s110
      %p116 = scmp.eq.s32.totalorder %s29, 0
      %p117 = por %p115, %p116
      %p118 = scmp.ne.s32.totalorder %s107, %s110
      %p119 = scmp.eq.s32.totalorder %s34, 1
      %p120 = por %p118, %p119
      %p121 = scmp.ne.s32.totalorder %s110, %s111
      %p122 = scmp.eq.s32.totalorder %s34, 0
      %p123 = por %p121, %p122
      %p124 = scmp.ne.s32.totalorder %s110, %s111
      %p125 = scmp.eq.s32.totalorder %s35, 1
      %p126 = por %p124, %p125
      %p128 = scmp.ne.s32.totalorder %s111, %s127
      %p129 = scmp.eq.s32.totalorder %s35, 0
      %p130 = por %p128, %p129
      %s131 = ssub.s32 %s29, %s36
      %p132 = scmp.eq.s32.totalorder %s131, 0
      %s134 = sadd.s32 %s133, 1
      %s135 = scalar_select %p132, %s133, %s134
      %p138 = pneg %p132
      %p139 = scmp.eq.s32.totalorder %s29, 1
      %p140 = por %p138, %p139
      %p141 = scmp.ne.s32.totalorder %s133, %s136
      %p142 = scmp.eq.s32.totalorder %s29, 0
      %p143 = por %p141, %p142
      %p144 = scmp.ne.s32.totalorder %s133, %s136
      %p145 = scmp.eq.s32.totalorder %s34, 1
      %p146 = por %p144, %p145
      %p147 = scmp.ne.s32.totalorder %s136, %s137
      %p148 = scmp.eq.s32.totalorder %s34, 0
      %p149 = por %p147, %p148
      %p150 = scmp.ne.s32.totalorder %s136, %s137
      %p151 = scmp.eq.s32.totalorder %s35, 1
      %p152 = por %p150, %p151
      %p154 = scmp.ne.s32.totalorder %s137, %s153
      %p155 = scmp.eq.s32.totalorder %s35, 0
      %p156 = por %p154, %p155
      %s157 = ssub.s32 %s29, %s36
      %p158 = scmp.eq.s32.totalorder %s157, 0
      %s160 = sadd.s32 %s159, 1
      %s161 = scalar_select %p158, %s159, %s160
      %p164 = pneg %p158
      %p165 = scmp.eq.s32.totalorder %s29, 1
      %p166 = por %p164, %p165
      %p167 = scmp.ne.s32.totalorder %s159, %s162
      %p168 = scmp.eq.s32.totalorder %s29, 0
      %p169 = por %p167, %p168
      %p170 = scmp.ne.s32.totalorder %s159, %s162
      %p171 = scmp.eq.s32.totalorder %s34, 1
      %p172 = por %p170, %p171
      %p173 = scmp.ne.s32.totalorder %s162, %s163
      %p174 = scmp.eq.s32.totalorder %s34, 0
      %p175 = por %p173, %p174
      %p176 = scmp.ne.s32.totalorder %s162, %s163
      %p177 = scmp.eq.s32.totalorder %s35, 1
      %p178 = por %p176, %p177
      %p180 = scmp.ne.s32.totalorder %s163, %s179
      %p181 = scmp.eq.s32.totalorder %s35, 0
      %p182 = por %p180, %p181
      %s183 = ssub.s32 %s29, %s36
      %p184 = scmp.eq.s32.totalorder %s183, 0
      %s186 = sadd.s32 %s185, 1
      %s187 = scalar_select %p184, %s185, %s186
      %p190 = pneg %p184
      %p191 = scmp.eq.s32.totalorder %s29, 1
      %p192 = por %p190, %p191
      %p193 = scmp.ne.s32.totalorder %s185, %s188
      %p194 = scmp.eq.s32.totalorder %s29, 0
      %p195 = por %p193, %p194
      %p196 = scmp.ne.s32.totalorder %s185, %s188
      %p197 = scmp.eq.s32.totalorder %s34, 1
      %p198 = por %p196, %p197
      %p199 = scmp.ne.s32.totalorder %s188, %s189
      %p200 = scmp.eq.s32.totalorder %s34, 0
      %p201 = por %p199, %p200
      %p202 = scmp.ne.s32.totalorder %s188, %s189
      %p203 = scmp.eq.s32.totalorder %s35, 1
      %p204 = por %p202, %p203
      %p206 = scmp.ne.s32.totalorder %s189, %s205
      %p207 = scmp.eq.s32.totalorder %s35, 0
      %p208 = por %p206, %p207
      %s209 = ssub.s32 %s29, %s36
      %p210 = scmp.eq.s32.totalorder %s209, 0
      %s212 = sadd.s32 %s211, 1
      %s213 = scalar_select %p210, %s211, %s212
      %p216 = pneg %p210
      %p217 = scmp.eq.s32.totalorder %s29, 1
      %p218 = por %p216, %p217
      %p219 = scmp.ne.s32.totalorder %s211, %s214
      %p220 = scmp.eq.s32.totalorder %s29, 0
      %p221 = por %p219, %p220
      %p222 = scmp.ne.s32.totalorder %s211, %s214
      %p223 = scmp.eq.s32.totalorder %s34, 1
      %p224 = por %p222, %p223
      %p225 = scmp.ne.s32.totalorder %s214, %s215
      %p226 = scmp.eq.s32.totalorder %s34, 0
      %p227 = por %p225, %p226
      %p228 = scmp.ne.s32.totalorder %s214, %s215
      %p229 = scmp.eq.s32.totalorder %s35, 1
      %p230 = por %p228, %p229
      %p232 = scmp.ne.s32.totalorder %s215, %s231
      %p233 = scmp.eq.s32.totalorder %s35, 0
      %p234 = por %p232, %p233
      %s235 = ssub.s32 %s29, %s36
      %p236 = scmp.eq.s32.totalorder %s235, 0
      %s238 = sadd.s32 %s237, 1
      %s239 = scalar_select %p236, %s237, %s238
      %p242 = pneg %p236
      %p243 = scmp.eq.s32.totalorder %s29, 1
      %p244 = por %p242, %p243
      %p245 = scmp.ne.s32.totalorder %s237, %s240
      %p246 = scmp.eq.s32.totalorder %s29, 0
      %p247 = por %p245, %p246
      %p248 = scmp.ne.s32.totalorder %s237, %s240
      %p249 = scmp.eq.s32.totalorder %s34, 1
      %p250 = por %p248, %p249
      %p251 = scmp.ne.s32.totalorder %s240, %s241
      %p252 = scmp.eq.s32.totalorder %s34, 0
      %p253 = por %p251, %p252
      %p254 = scmp.ne.s32.totalorder %s240, %s241
      %p255 = scmp.eq.s32.totalorder %s35, 1
      %p256 = por %p254, %p255
      %p258 = scmp.ne.s32.totalorder %s241, %s257
      %p259 = scmp.eq.s32.totalorder %s35, 0
      %p260 = por %p258, %p259
      %s261 = ssub.s32 %s29, %s36
      %p262 = scmp.eq.s32.totalorder %s261, 0
      %s264 = sadd.s32 %s263, 1
      %s265 = scalar_select %p262, %s263, %s264
      %p268 = pneg %p262
      %p269 = scmp.eq.s32.totalorder %s29, 1
      %p270 = por %p268, %p269
      %p271 = scmp.ne.s32.totalorder %s263, %s266
      %p272 = scmp.eq.s32.totalorder %s29, 0
      %p273 = por %p271, %p272
      %p274 = scmp.ne.s32.totalorder %s263, %s266
      %p275 = scmp.eq.s32.totalorder %s34, 1
      %p276 = por %p274, %p275
      %p277 = scmp.ne.s32.totalorder %s266, %s267
      %p278 = scmp.eq.s32.totalorder %s34, 0
      %p279 = por %p277, %p278
      %p280 = scmp.ne.s32.totalorder %s266, %s267
      %p281 = scmp.eq.s32.totalorder %s35, 1
      %p282 = por %p280, %p281
      %p284 = scmp.ne.s32.totalorder %s267, %s283
      %p285 = scmp.eq.s32.totalorder %s35, 0
      %p286 = por %p284, %p285
      %s287 = ssub.s32 %s29, %s36
      %p288 = scmp.eq.s32.totalorder %s287, 0
      %s290 = sadd.s32 %s289, 1
      %s291 = scalar_select %p288, %s289, %s290
      %p294 = pneg %p288
      %p295 = scmp.eq.s32.totalorder %s29, 1
      %p296 = por %p294, %p295
      %p297 = scmp.ne.s32.totalorder %s289, %s292
      %p298 = scmp.eq.s32.totalorder %s29, 0
      %p299 = por %p297, %p298
      %p300 = scmp.ne.s32.totalorder %s289, %s292
      %p301 = scmp.eq.s32.totalorder %s34, 1
      %p302 = por %p300, %p301
      %p303 = scmp.ne.s32.totalorder %s292, %s293
      %p304 = scmp.eq.s32.totalorder %s34, 0
      %p305 = por %p303, %p304
      %p306 = scmp.ne.s32.totalorder %s292, %s293
      %p307 = scmp.eq.s32.totalorder %s35, 1
      %p308 = por %p306, %p307
      %p310 = scmp.ne.s32.totalorder %s293, %s309
      %p311 = scmp.eq.s32.totalorder %s35, 0
      %p312 = por %p310, %p311
      %s313 = ssub.s32 %s29, %s36
      %p314 = scmp.eq.s32.totalorder %s313, 0
      %s316 = sadd.s32 %s315, 1
      %s317 = scalar_select %p314, %s315, %s316
      %p320 = pneg %p314
      %p321 = scmp.eq.s32.totalorder %s29, 1
      %p322 = por %p320, %p321
      %p323 = scmp.ne.s32.totalorder %s315, %s318
      %p324 = scmp.eq.s32.totalorder %s29, 0
      %p325 = por %p323, %p324
      %p326 = scmp.ne.s32.totalorder %s315, %s318
      %p327 = scmp.eq.s32.totalorder %s34, 1
      %p328 = por %p326, %p327
      %p329 = scmp.ne.s32.totalorder %s318, %s319
      %p330 = scmp.eq.s32.totalorder %s34, 0
      %p331 = por %p329, %p330
      %p332 = scmp.ne.s32.totalorder %s318, %s319
      %p333 = scmp.eq.s32.totalorder %s35, 1
      %p334 = por %p332, %p333
      %p336 = scmp.ne.s32.totalorder %s319, %s335
      %p337 = scmp.eq.s32.totalorder %s35, 0
      %p338 = por %p336, %p337
      %s339 = ssub.s32 %s29, %s36
      %p340 = scmp.eq.s32.totalorder %s339, 0
      %s342 = sadd.s32 %s341, 1
      %s343 = scalar_select %p340, %s341, %s342
      %p346 = pneg %p340
      %p347 = scmp.eq.s32.totalorder %s29, 1
      %p348 = por %p346, %p347
      %p349 = scmp.ne.s32.totalorder %s341, %s344
      %p350 = scmp.eq.s32.totalorder %s29, 0
      %p351 = por %p349, %p350
      %p352 = scmp.ne.s32.totalorder %s341, %s344
      %p353 = scmp.eq.s32.totalorder %s34, 1
      %p354 = por %p352, %p353
      %p355 = scmp.ne.s32.totalorder %s344, %s345
      %p356 = scmp.eq.s32.totalorder %s34, 0
      %p357 = por %p355, %p356
      %p358 = scmp.ne.s32.totalorder %s344, %s345
      %p359 = scmp.eq.s32.totalorder %s35, 1
      %p360 = por %p358, %p359
      %p362 = scmp.ne.s32.totalorder %s345, %s361
      %p363 = scmp.eq.s32.totalorder %s35, 0
      %p364 = por %p362, %p363
      %s365 = ssub.s32 %s29, %s36
      %p366 = scmp.eq.s32.totalorder %s365, 0
      %s368 = sadd.s32 %s367, 1
      %s369 = scalar_select %p366, %s367, %s368
      %p372 = pneg %p366
      %p373 = scmp.eq.s32.totalorder %s29, 1
      %p374 = por %p372, %p373
      %p375 = scmp.ne.s32.totalorder %s367, %s370
      %p376 = scmp.eq.s32.totalorder %s29, 0
      %p377 = por %p375, %p376
      %p378 = scmp.ne.s32.totalorder %s367, %s370
      %p379 = scmp.eq.s32.totalorder %s34, 1
      %p380 = por %p378, %p379
      %p381 = scmp.ne.s32.totalorder %s370, %s371
      %p382 = scmp.eq.s32.totalorder %s34, 0
      %p383 = por %p381, %p382
      %p384 = scmp.ne.s32.totalorder %s370, %s371
      %p385 = scmp.eq.s32.totalorder %s35, 1
      %p386 = por %p384, %p385
      %p388 = scmp.ne.s32.totalorder %s371, %s387
      %p389 = scmp.eq.s32.totalorder %s35, 0
      %p390 = por %p388, %p389
      %s392 = sadd.s32 %s391, 1
      %p395 = scmp.eq.s32.totalorder %s29, 1
      %p396 = scmp.ne.s32.totalorder %s391, %s393
      %p397 = scmp.eq.s32.totalorder %s29, 0
      %p398 = por %p396, %p397
      %p399 = scmp.ne.s32.totalorder %s391, %s393
      %p400 = scmp.eq.s32.totalorder %s34, 1
      %p401 = por %p399, %p400
      %p402 = scmp.ne.s32.totalorder %s393, %s394
      %p403 = scmp.eq.s32.totalorder %s34, 0
      %p404 = por %p402, %p403
      %p405 = scmp.ne.s32.totalorder %s393, %s394
      %p406 = scmp.eq.s32.totalorder %s35, 1
      %p407 = por %p405, %p406
      %p409 = scmp.ne.s32.totalorder %s394, %s408
      %p410 = scmp.eq.s32.totalorder %s35, 0
      %p411 = por %p409, %p410
      %s412 = ssub.s32 %s29, %s36
      %p413 = scmp.eq.s32.totalorder %s412, 0
      %s415 = sadd.s32 %s414, 1
      %s416 = scalar_select %p413, %s414, %s415
      %p419 = pneg %p413
      %p420 = scmp.eq.s32.totalorder %s29, 1
      %p421 = por %p419, %p420
      %p422 = scmp.ne.s32.totalorder %s414, %s417
      %p423 = scmp.eq.s32.totalorder %s29, 0
      %p424 = por %p422, %p423
      %p425 = scmp.ne.s32.totalorder %s414, %s417
      %p426 = scmp.eq.s32.totalorder %s34, 1
      %p427 = por %p425, %p426
      %p428 = scmp.ne.s32.totalorder %s417, %s418
      %p429 = scmp.eq.s32.totalorder %s34, 0
      %p430 = por %p428, %p429
      %p431 = scmp.ne.s32.totalorder %s417, %s418
      %p432 = scmp.eq.s32.totalorder %s35, 1
      %p433 = por %p431, %p432
      %p435 = scmp.ne.s32.totalorder %s418, %s434
      %p436 = scmp.eq.s32.totalorder %s35, 0
      %p437 = por %p435, %p436
      %p438 = scmp.le.s32.totalorder 1, %s29
      %p439 = scmp.lt.s32.totalorder %s29, 3
      %p440 = pnand %p438, %p439
      %p441 = pneg %p440
      // Predicated region
      $region9: #{_lambda_.1} parent=5 // pred_check
        _
      $region10: #{_lambda_.1} parent=5 // pred_check_branch
        %443 = sbr.rel (%p440) target = $region12
      $region11: #{_lambda_.1} parent=5 // pred_region
        %s444 = ssub.s32 %s29, 1
        // Predicated region
        $region13: #{_lambda_.1} parent=11 // pred_check
          %p445 = pneg %p50
        $region14: #{_lambda_.1} parent=11 // pred_check_branch
          %447 = sbr.rel (%p445) target = $region16
        $region15: #{_lambda_.1} parent=11 // pred_region
          _
        $region16: #{_lambda_.1} parent=11 // pred_fallthru
          _
        // Predicated region
        $region17: #{_lambda_.1} parent=11 // pred_check
          %p448 = pneg %p71
        $region18: #{_lambda_.1} parent=11 // pred_check_branch
          %450 = sbr.rel (%p448) target = $region20
        $region19: #{_lambda_.1} parent=11 // pred_region
          _
        $region20: #{_lambda_.1} parent=11 // pred_fallthru
          _
      $region12: #{_lambda_.1} parent=5 // pred_fallthru
        _
      %p451 = scmp.lt.s32.totalorder %s29, 2
      // Predicated region
      $region21: #{_lambda_.1} parent=5 // pred_check
        %p452 = pneg %p451
      $region22: #{_lambda_.1} parent=5 // pred_check_branch
        %454 = sbr.rel (%p452) target = $region24
      $region23: #{_lambda_.1} parent=5 // pred_region
        // Predicated region
        $region25: #{_lambda_.1} parent=23 // pred_check
          %p455 = pneg %p91
        $region26: #{_lambda_.1} parent=23 // pred_check_branch
          %457 = sbr.rel (%p455) target = $region28
        $region27: #{_lambda_.1} parent=23 // pred_region
          %s458 = sand.u32 %s81, 1
          %s459 = scalar_lea.sflag [#allocation3], %s458
          %s460 = sand.u32 %s81, 1
          %s461 = smul.addr %s460, 192
          %s462 = scalar_lea.vmem [#allocation2], %s461
          %464 = vsyncadd %s459, 0
          %s465 = smul.addr %s29, 48
          %s466 = smul.addr %s465, 4
          %s467 = scalar_lea.hbm %s2, %s466
          %s468 = sshll.u32 %s467, 4
          %s469 = int_to_ptr.hbm [resolvable:$true] %s468
          %s470 = sshll.u32 %s462, 4
          %s471 = int_to_ptr.vmem [resolvable:$true] %s470
          %476 = dma.hbm_to_vmem [thread:$0]  %s469, 3072, %s471, %s459, 192, 192, 12
        $region28: #{_lambda_.1} parent=23 // pred_fallthru
          _
        // Predicated region
        $region29: #{_lambda_.1} parent=23 // pred_check
          %p477 = pneg %p117
        $region30: #{_lambda_.1} parent=23 // pred_check_branch
          %479 = sbr.rel (%p477) target = $region32
        $region31: #{_lambda_.1} parent=23 // pred_region
          %p480 = scmp.lt.s32.totalorder %s29, 1
          %s481 = scalar_select %p480, %s29, 1
          %s482 = smul.addr %s481, 3
          %s483 = scalar_lea.vmem %s3, %s482
        $region32: #{_lambda_.1} parent=23 // pred_fallthru
          _
        // Predicated region
        $region33: #{_lambda_.1} parent=23 // pred_check
          %p484 = pneg %p143
        $region34: #{_lambda_.1} parent=23 // pred_check_branch
          %486 = sbr.rel (%p484) target = $region36
        $region35: #{_lambda_.1} parent=23 // pred_region
          %p487 = scmp.lt.s32.totalorder %s29, 1
          %s488 = scalar_select %p487, %s29, 1
          %s489 = smul.addr %s488, 16
          %s490 = smul.addr %s489, 4
          %s491 = scalar_lea.vmem %s4, %s490
        $region36: #{_lambda_.1} parent=23 // pred_fallthru
          _
        // Predicated region
        $region37: #{_lambda_.1} parent=23 // pred_check
          %p492 = pneg %p169
        $region38: #{_lambda_.1} parent=23 // pred_check_branch
          %494 = sbr.rel (%p492) target = $region40
        $region39: #{_lambda_.1} parent=23 // pred_region
          %p495 = scmp.lt.s32.totalorder %s29, 1
          %s496 = scalar_select %p495, %s29, 1
          %s497 = scalar_lea.vmem %s5, %s496
        $region40: #{_lambda_.1} parent=23 // pred_fallthru
          _
        // Predicated region
        $region41: #{_lambda_.1} parent=23 // pred_check
          %p498 = pneg %p195
        $region42: #{_lambda_.1} parent=23 // pred_check_branch
          %500 = sbr.rel (%p498) target = $region44
        $region43: #{_lambda_.1} parent=23 // pred_region
          %p501 = scmp.lt.s32.totalorder %s29, 1
          %s502 = scalar_select %p501, %s29, 1
          %s503 = scalar_lea.vmem %s6, %s502
        $region44: #{_lambda_.1} parent=23 // pred_fallthru
          _
        // Predicated region
        $region45: #{_lambda_.1} parent=23 // pred_check
          %p504 = pneg %p221
        $region46: #{_lambda_.1} parent=23 // pred_check_branch
          %506 = sbr.rel (%p504) target = $region48
        $region47: #{_lambda_.1} parent=23 // pred_region
          %p507 = scmp.lt.s32.totalorder %s29, 1
          %s508 = scalar_select %p507, %s29, 1
          %s509 = scalar_lea.vmem %s7, %s508
        $region48: #{_lambda_.1} parent=23 // pred_fallthru
          _
        // Predicated region
        $region49: #{_lambda_.1} parent=23 // pred_check
          %p510 = pneg %p247
        $region50: #{_lambda_.1} parent=23 // pred_check_branch
          %512 = sbr.rel (%p510) target = $region52
        $region51: #{_lambda_.1} parent=23 // pred_region
          %s513 = sand.u32 %s29, 1
          %s514 = scalar_lea.sflag [#allocation6], %s513
          %s515 = sand.u32 %s237, 1
          %s516 = smul.addr %s515, 128
          %s517 = scalar_lea.vmem [#allocation5], %s516
          %519 = vsyncadd %s514, 0
          %s520 = smul.addr %s29, 32
          %s521 = smul.addr %s520, 4
          %s522 = scalar_lea.hbm %s8, %s521
          %s523 = sshll.u32 %s522, 4
          %s524 = int_to_ptr.hbm [resolvable:$true] %s523
          %s525 = sshll.u32 %s517, 4
          %s526 = int_to_ptr.vmem [resolvable:$true] %s525
          %531 = dma.hbm_to_vmem [thread:$0]  %s524, 2048, %s526, %s514, 128, 128, 8
        $region52: #{_lambda_.1} parent=23 // pred_fallthru
          _
        // Predicated region
        $region53: #{_lambda_.1} parent=23 // pred_check
          %p532 = pneg %p273
        $region54: #{_lambda_.1} parent=23 // pred_check_branch
          %534 = sbr.rel (%p532) target = $region56
        $region55: #{_lambda_.1} parent=23 // pred_region
          %p535 = scmp.lt.s32.totalorder %s29, 1
          %s536 = scalar_select %p535, %s29, 1
          %s537 = smul.addr %s536, 2
          %s538 = scalar_lea.vmem %s9, %s537
        $region56: #{_lambda_.1} parent=23 // pred_fallthru
          _
        // Predicated region
        $region57: #{_lambda_.1} parent=23 // pred_check
          %p539 = pneg %p299
        $region58: #{_lambda_.1} parent=23 // pred_check_branch
          %541 = sbr.rel (%p539) target = $region60
        $region59: #{_lambda_.1} parent=23 // pred_region
          %s542 = sand.u32 %s29, 1
          %s543 = scalar_lea.sflag [#allocation6], %s542
          %s544 = sand.u32 %s289, 1
          %s545 = smul.addr %s544, 128
          %s546 = scalar_lea.vmem [#allocation7], %s545
          %548 = vsyncadd %s543, 0
          %s549 = smul.addr %s29, 32
          %s550 = smul.addr %s549, 4
          %s551 = scalar_lea.hbm %s10, %s550
          %s552 = sshll.u32 %s551, 4
          %s553 = int_to_ptr.hbm [resolvable:$true] %s552
          %s554 = sshll.u32 %s546, 4
          %s555 = int_to_ptr.vmem [resolvable:$true] %s554
          %560 = dma.hbm_to_vmem [thread:$0]  %s553, 2048, %s555, %s543, 64, 64, 4
        $region60: #{_lambda_.1} parent=23 // pred_fallthru
          _
        // Predicated region
        $region61: #{_lambda_.1} parent=23 // pred_check
          %p561 = pneg %p325
        $region62: #{_lambda_.1} parent=23 // pred_check_branch
          %563 = sbr.rel (%p561) target = $region64
        $region63: #{_lambda_.1} parent=23 // pred_region
          %p564 = scmp.lt.s32.totalorder %s29, 1
          %s565 = scalar_select %p564, %s29, 1
          %s566 = scalar_lea.vmem %s11, %s565
        $region64: #{_lambda_.1} parent=23 // pred_fallthru
          _
        // Predicated region
        $region65: #{_lambda_.1} parent=23 // pred_check
          %p567 = pneg %p351
        $region66: #{_lambda_.1} parent=23 // pred_check_branch
          %569 = sbr.rel (%p567) target = $region68
        $region67: #{_lambda_.1} parent=23 // pred_region
          %p570 = scmp.lt.s32.totalorder %s29, 1
          %s571 = scalar_select %p570, %s29, 1
          %s572 = scalar_lea.vmem %s12, %s571
        $region68: #{_lambda_.1} parent=23 // pred_fallthru
          _
        // Predicated region
        $region69: #{_lambda_.1} parent=23 // pred_check
          %p573 = pneg %p377
        $region70: #{_lambda_.1} parent=23 // pred_check_branch
          %575 = sbr.rel (%p573) target = $region72
        $region71: #{_lambda_.1} parent=23 // pred_region
          %p576 = scmp.lt.s32.totalorder %s29, 1
          %s577 = scalar_select %p576, %s29, 1
          %s578 = scalar_lea.vmem %s13, %s577
        $region72: #{_lambda_.1} parent=23 // pred_fallthru
          _
      $region24: #{_lambda_.1} parent=5 // pred_fallthru
        _
      %p579 = scmp.le.s32.totalorder 1, %s29
      %p580 = scmp.lt.s32.totalorder %s29, 3
      %p581 = pnand %p579, %p580
      %p582 = pneg %p581
      // Predicated region
      $region73: #{_lambda_.1} parent=5 // pred_check
        _
      $region74: #{_lambda_.1} parent=5 // pred_check_branch
        %584 = sbr.rel (%p581) target = $region76
      $region75: #{_lambda_.1} parent=5 // pred_region
        %s585 = ssub.s32 %s29, 1
        %s586 = sand.u32 %s84, 1
        %s587 = scalar_lea.sflag [#allocation3], %s586
        %s588 = sand.u32 %s84, 1
        %s589 = smul.addr %s588, 192
        %s590 = scalar_lea.vmem [#allocation2], %s589
        // Predicated region
        $region77: #{_lambda_.1} parent=75 // pred_check
          %p591 = pneg %p97
        $region78: #{_lambda_.1} parent=75 // pred_check_branch
          %593 = sbr.rel (%p591) target = $region80
        $region79: #{_lambda_.1} parent=75 // pred_region
          %595 = dma.done %s587, 3072
        $region80: #{_lambda_.1} parent=75 // pred_fallthru
          _
        %s596 = sand.u32 %s34, 1
        %s597 = scalar_lea.sflag [#allocation6], %s596
        %s598 = sand.u32 %s240, 1
        %s599 = smul.addr %s598, 128
        %s600 = scalar_lea.vmem [#allocation5], %s599
        // Predicated region
        $region81: #{_lambda_.1} parent=75 // pred_check
          %p601 = pneg %p253
        $region82: #{_lambda_.1} parent=75 // pred_check_branch
          %603 = sbr.rel (%p601) target = $region84
        $region83: #{_lambda_.1} parent=75 // pred_region
          %605 = dma.done %s597, 2048
        $region84: #{_lambda_.1} parent=75 // pred_fallthru
          _
        %s606 = sand.u32 %s34, 1
        %s607 = scalar_lea.sflag [#allocation6], %s606
        %s608 = sand.u32 %s292, 1
        %s609 = smul.addr %s608, 128
        %s610 = scalar_lea.vmem [#allocation7], %s609
        // Predicated region
        $region85: #{_lambda_.1} parent=75 // pred_check
          %p611 = pneg %p305
        $region86: #{_lambda_.1} parent=75 // pred_check_branch
          %613 = sbr.rel (%p611) target = $region88
        $region87: #{_lambda_.1} parent=75 // pred_region
          %615 = dma.done %s607, 2048
        $region88: #{_lambda_.1} parent=75 // pred_fallthru
          _
        %p616 = pneg %p50
        %p617 = pneg %p47
        %p618 = pneg %p71
        %p619 = pneg %p68
        %s620 = sand.u32 %s84, 1
        %s621 = scalar_lea.sflag [#allocation3], %s620
        %s622 = sand.u32 %s84, 1
        %s623 = smul.addr %s622, 192
        %s624 = scalar_lea.vmem [#allocation2], %s623
        %p625 = pneg %p97
        %p626 = pneg %p94
        %p627 = scmp.lt.s32.totalorder %s34, 1
        %s628 = scalar_select %p627, %s34, 1
        %s629 = smul.addr %s628, 3
        %s630 = scalar_lea.vmem %s3, %s629
        %p631 = pneg %p123
        %p632 = pneg %p120
        %p633 = scmp.lt.s32.totalorder %s34, 1
        %s634 = scalar_select %p633, %s34, 1
        %s635 = smul.addr %s634, 16
        %s636 = smul.addr %s635, 4
        %s637 = scalar_lea.vmem %s4, %s636
        %p638 = pneg %p149
        %p639 = pneg %p146
        %p640 = scmp.lt.s32.totalorder %s34, 1
        %s641 = scalar_select %p640, %s34, 1
        %s642 = scalar_lea.vmem %s5, %s641
        %p643 = pneg %p175
        %p644 = pneg %p172
        %p645 = scmp.lt.s32.totalorder %s34, 1
        %s646 = scalar_select %p645, %s34, 1
        %s647 = scalar_lea.vmem %s6, %s646
        %p648 = pneg %p201
        %p649 = pneg %p198
        %p650 = scmp.lt.s32.totalorder %s34, 1
        %s651 = scalar_select %p650, %s34, 1
        %s652 = scalar_lea.vmem %s7, %s651
        %p653 = pneg %p227
        %p654 = pneg %p224
        %s655 = sand.u32 %s34, 1
        %s656 = scalar_lea.sflag [#allocation6], %s655
        %s657 = sand.u32 %s240, 1
        %s658 = smul.addr %s657, 128
        %s659 = scalar_lea.vmem [#allocation5], %s658
        %p660 = pneg %p253
        %p661 = pneg %p250
        %p662 = scmp.lt.s32.totalorder %s34, 1
        %s663 = scalar_select %p662, %s34, 1
        %s664 = smul.addr %s663, 2
        %s665 = scalar_lea.vmem %s9, %s664
        %p666 = pneg %p279
        %p667 = pneg %p276
        %s668 = sand.u32 %s34, 1
        %s669 = scalar_lea.sflag [#allocation6], %s668
        %s670 = sand.u32 %s292, 1
        %s671 = smul.addr %s670, 128
        %s672 = scalar_lea.vmem [#allocation7], %s671
        %p673 = pneg %p305
        %p674 = pneg %p302
        %p675 = scmp.lt.s32.totalorder %s34, 1
        %s676 = scalar_select %p675, %s34, 1
        %s677 = scalar_lea.vmem %s11, %s676
        %p678 = pneg %p331
        %p679 = pneg %p328
        %p680 = scmp.lt.s32.totalorder %s34, 1
        %s681 = scalar_select %p680, %s34, 1
        %s682 = scalar_lea.vmem %s12, %s681
        %p683 = pneg %p357
        %p684 = pneg %p354
        %p685 = scmp.lt.s32.totalorder %s34, 1
        %s686 = scalar_select %p685, %s34, 1
        %s687 = scalar_lea.vmem %s13, %s686
        %p688 = pneg %p383
        %p689 = pneg %p380
        %p690 = pneg %p404
        %p691 = pneg %p401
        %p692 = pneg %p430
        %p693 = pneg %p427
        %p694 = scmp.lt.s32.totalorder %s34, 1
        %s695 = scalar_select %p694, %s34, 1
        %s696 = smul.addr %s695, 8
        %s697 = smul.addr %s696, 8
        %s698 = scalar_lea.vmem %s15, %s697
        %p699 = scmp.lt.s32.totalorder %s34, 1
        %s700 = scalar_select %p699, %s34, 1
        %s701 = smul.addr %s700, 3
        %s702 = scalar_lea.vmem %s3, %s701
        %p703 = scmp.lt.s32.totalorder %s34, 1
        %s704 = scalar_select %p703, %s34, 1
        %s705 = smul.addr %s704, 16
        %s706 = smul.addr %s705, 4
        %s707 = scalar_lea.vmem %s4, %s706
        %p708 = scmp.lt.s32.totalorder %s34, 1
        %s709 = scalar_select %p708, %s34, 1
        %s710 = scalar_lea.vmem %s5, %s709
        %p711 = scmp.lt.s32.totalorder %s34, 1
        %s712 = scalar_select %p711, %s34, 1
        %s713 = scalar_lea.vmem %s6, %s712
        %p714 = scmp.lt.s32.totalorder %s34, 1
        %s715 = scalar_select %p714, %s34, 1
        %s716 = scalar_lea.vmem %s7, %s715
        %p717 = scmp.lt.s32.totalorder %s34, 1
        %s718 = scalar_select %p717, %s34, 1
        %s719 = smul.addr %s718, 2
        %s720 = scalar_lea.vmem %s9, %s719
        %p721 = scmp.lt.s32.totalorder %s34, 1
        %s722 = scalar_select %p721, %s34, 1
        %s723 = scalar_lea.vmem %s11, %s722
        %p724 = scmp.lt.s32.totalorder %s34, 1
        %s725 = scalar_select %p724, %s34, 1
        %s726 = scalar_lea.vmem %s12, %s725
        %p727 = scmp.lt.s32.totalorder %s34, 1
        %s728 = scalar_select %p727, %s34, 1
        %s729 = scalar_lea.vmem %s13, %s728
        %p730 = scmp.lt.s32.totalorder %s34, 1
        %s731 = scalar_select %p730, %s34, 1
        %s732 = smul.addr %s731, 8
        %s733 = smul.addr %s732, 8
        %s734 = scalar_lea.vmem %s15, %s733
        %p736 = scmp.eq.s32.totalorder %s34, 0
        // Predicated region
        $region89: #{_lambda_.1} parent=75 // pred_check
          %p737 = pneg %p736
        $region90: #{_lambda_.1} parent=75 // pred_check_branch
          %739 = sbr.rel (%p737) target = $region92
        $region91: #{_lambda_.1} parent=75 // pred_region
          %v740 = vld [vmem:[%s0] sm:$0xff]
          %v741 = vld [vmem:[%s0 + $0x8] sm:$0xff]
          %742 = vst [vmem:[#allocation8] sm:$0xff] %v740
          %743 = vst [vmem:[#allocation8 + $0x8] sm:$0xff] %v741
        $region92: #{_lambda_.1} parent=75 // pred_fallthru
          _
        %v744 = vld [vmem:[#allocation8] sm:$0xff]
        %v745 = vld [vmem:[#allocation8 + $0x8] sm:$0xff]
        %v746 = vld [vmem:[%s1] sm:$0x3]
        %v747 = vpack.c.bf16 %v745, %v744
        %v748 = vld [vmem:[%s590] sm:$0xff]
        %v749 = vld [vmem:[%s590 + $0x8] sm:$0xf]
        %v750 = vld [vmem:[%s590 + $0xc] sm:$0xff]
        %v751 = vld [vmem:[%s590 + $0x14] sm:$0xf]
        %v752 = vld [vmem:[%s590 + $0x18] sm:$0xff]
        %v753 = vld [vmem:[%s590 + $0x20] sm:$0xf]
        %v754 = vld [vmem:[%s590 + $0x24] sm:$0xff]
        %v755 = vld [vmem:[%s590 + $0x2c] sm:$0xf]
        %v756 = vld [vmem:[%s590 + $0x30] sm:$0xff]
        %v757 = vld [vmem:[%s590 + $0x38] sm:$0xf]
        %v758 = vld [vmem:[%s590 + $0x3c] sm:$0xff]
        %v759 = vld [vmem:[%s590 + $0x44] sm:$0xf]
        %v760 = vld [vmem:[%s590 + $0x48] sm:$0xff]
        %v761 = vld [vmem:[%s590 + $0x50] sm:$0xf]
        %v762 = vld [vmem:[%s590 + $0x54] sm:$0xff]
        %v763 = vld [vmem:[%s590 + $0x5c] sm:$0xf]
        %v764 = vld [vmem:[%s590 + $0x60] sm:$0xff]
        %v765 = vld [vmem:[%s590 + $0x68] sm:$0xf]
        %v766 = vld [vmem:[%s590 + $0x6c] sm:$0xff]
        %v767 = vld [vmem:[%s590 + $0x74] sm:$0xf]
        %v768 = vld [vmem:[%s590 + $0x78] sm:$0xff]
        %v769 = vld [vmem:[%s590 + $0x80] sm:$0xf]
        %v770 = vld [vmem:[%s590 + $0x84] sm:$0xff]
        %v771 = vld [vmem:[%s590 + $0x8c] sm:$0xf]
        %v772 = vld [vmem:[%s590 + $0x90] sm:$0xff]
        %v773 = vld [vmem:[%s590 + $0x98] sm:$0xf]
        %v774 = vld [vmem:[%s590 + $0x9c] sm:$0xff]
        %v775 = vld [vmem:[%s590 + $0xa4] sm:$0xf]
        %v776 = vld [vmem:[%s590 + $0xa8] sm:$0xff]
        %v777 = vld [vmem:[%s590 + $0xb0] sm:$0xf]
        %v778 = vld [vmem:[%s590 + $0xb4] sm:$0xff]
        %v779 = vld [vmem:[%s590 + $0xbc] sm:$0xf]
        %v780 = vld [vmem:[%s702] sm:$0x7]
        %v782 = vperm.slane %v780, 0
        %v783 = vperm.slane %v780, 1
        %v784 = vperm.slane %v780, 2
        %v820 = vunpack.c.l.b16 %v748
        %v821 = vunpack.c.h.b16 %v748
        %v822 = vunpack.c.l.b16 %v749
        %v823 = vunpack.c.l.b16 %v750
        %v824 = vunpack.c.h.b16 %v750
        %v825 = vunpack.c.l.b16 %v751
        %v826 = vunpack.c.l.b16 %v752
        %v827 = vunpack.c.h.b16 %v752
        %v828 = vunpack.c.l.b16 %v753
        %v829 = vunpack.c.l.b16 %v754
        %v830 = vunpack.c.h.b16 %v754
        %v831 = vunpack.c.l.b16 %v755
        %v832 = vunpack.c.l.b16 %v756
        %v833 = vunpack.c.h.b16 %v756
        %v834 = vunpack.c.l.b16 %v757
        %v835 = vunpack.c.l.b16 %v758
        %v836 = vunpack.c.h.b16 %v758
        %v837 = vunpack.c.l.b16 %v759
        %v838 = vunpack.c.l.b16 %v760
        %v839 = vunpack.c.h.b16 %v760
        %v840 = vunpack.c.l.b16 %v761
        %v841 = vunpack.c.l.b16 %v762
        %v842 = vunpack.c.h.b16 %v762
        %v843 = vunpack.c.l.b16 %v763
        %v844 = vunpack.c.l.b16 %v764
        %v845 = vunpack.c.h.b16 %v764
        %v846 = vunpack.c.l.b16 %v765
        %v847 = vunpack.c.l.b16 %v766
        %v848 = vunpack.c.h.b16 %v766
        %v849 = vunpack.c.l.b16 %v767
        %v850 = vunpack.c.l.b16 %v768
        %v851 = vunpack.c.h.b16 %v768
        %v852 = vunpack.c.l.b16 %v769
        %v853 = vunpack.c.l.b16 %v770
        %v854 = vunpack.c.h.b16 %v770
        %v855 = vunpack.c.l.b16 %v771
        %v856 = vunpack.c.l.b16 %v772
        %v857 = vunpack.c.h.b16 %v772
        %v858 = vunpack.c.l.b16 %v773
        %v859 = vunpack.c.l.b16 %v774
        %v860 = vunpack.c.h.b16 %v774
        %v861 = vunpack.c.l.b16 %v775
        %v862 = vunpack.c.l.b16 %v776
        %v863 = vunpack.c.h.b16 %v776
        %v864 = vunpack.c.l.b16 %v777
        %v865 = vunpack.c.l.b16 %v778
        %v866 = vunpack.c.h.b16 %v778
        %v867 = vunpack.c.l.b16 %v779
        %v868 = vpack.c.b16 %v823, %v820
        %v869 = vpack.c.b16 %v824, %v821
        %v870 = vpack.c.b16 %v825, %v822
        %v871 = vpack.c.b16 %v829, %v826
        %v872 = vpack.c.b16 %v830, %v827
        %v873 = vpack.c.b16 %v831, %v828
        %v874 = vpack.c.b16 %v835, %v832
        %v875 = vpack.c.b16 %v836, %v833
        %v876 = vpack.c.b16 %v837, %v834
        %v877 = vpack.c.b16 %v841, %v838
        %v878 = vpack.c.b16 %v842, %v839
        %v879 = vpack.c.b16 %v843, %v840
        %v880 = vpack.c.b16 %v847, %v844
        %v881 = vpack.c.b16 %v848, %v845
        %v882 = vpack.c.b16 %v849, %v846
        %v883 = vpack.c.b16 %v853, %v850
        %v884 = vpack.c.b16 %v854, %v851
        %v885 = vpack.c.b16 %v855, %v852
        %v886 = vpack.c.b16 %v859, %v856
        %v887 = vpack.c.b16 %v860, %v857
        %v888 = vpack.c.b16 %v861, %v858
        %v889 = vpack.c.b16 %v865, %v862
        %v890 = vpack.c.b16 %v866, %v863
        %v891 = vpack.c.b16 %v867, %v864
        %916 = vmatpush.bf16.msra.mxu0 %v889
        %917 = vmatpush.bf16.msra.mxu0 %v886
        %918 = vmatpush.bf16.msra.mxu0 %v883
        %919 = vmatpush.bf16.msra.mxu0 %v880
        %920 = vmatpush.bf16.msra.mxu0 %v877
        %921 = vmatpush.bf16.msra.mxu0 %v874
        %922 = vmatpush.bf16.msra.mxu0 %v871
        %923 = vmatpush.bf16.msra.mxu0 %v868
        %924 = vmatmul.bf16.gmra.mxu0 %v747
        %v925 = vpop.f32.mrf.mxu0
        %v926 = vadd.f32 %v782, %v925
        %v927 = vpop.f32.mrf.mxu0
        %v928 = vadd.f32 %v782, %v927
        %929 = vdwg.mxu0
        %930 = vmatpush.bf16.msra.mxu0 %v890
        %931 = vmatpush.bf16.msra.mxu0 %v887
        %932 = vmatpush.bf16.msra.mxu0 %v884
        %933 = vmatpush.bf16.msra.mxu0 %v881
        %934 = vmatpush.bf16.msra.mxu0 %v878
        %935 = vmatpush.bf16.msra.mxu0 %v875
        %936 = vmatpush.bf16.msra.mxu0 %v872
        %937 = vmatpush.bf16.msra.mxu0 %v869
        %938 = vmatmul.bf16.gmra.mxu0 %v747
        %v939 = vpop.f32.mrf.mxu0
        %v940 = vadd.f32 %v783, %v939
        %v941 = vpop.f32.mrf.mxu0
        %v942 = vadd.f32 %v783, %v941
        %943 = vdwg.mxu0
        %944 = vmatpush.bf16.msra.mxu0 %v891
        %945 = vmatpush.bf16.msra.mxu0 %v888
        %946 = vmatpush.bf16.msra.mxu0 %v885
        %947 = vmatpush.bf16.msra.mxu0 %v882
        %948 = vmatpush.bf16.msra.mxu0 %v879
        %949 = vmatpush.bf16.msra.mxu0 %v876
        %950 = vmatpush.bf16.msra.mxu0 %v873
        %951 = vmatpush.bf16.msra.mxu0 %v870
        %952 = vmatmul.bf16.gmra.mxu0 %v747
        %v953 = vpop.f32.mrf.mxu0
        %v954 = vadd.f32 %v784, %v953
        %v955 = vpop.f32.mrf.mxu0
        %v956 = vadd.f32 %v784, %v955
        %957 = vdwg.mxu0
        %v958 = vld [vmem:[%s707] sm:$0xf]
        %v959 = vld [vmem:[%s707 + $0x4] sm:$0xf]
        %v960 = vld [vmem:[%s707 + $0x8] sm:$0xf]
        %v961 = vld [vmem:[%s707 + $0xc] sm:$0xf]
        %v962 = vld [vmem:[%s707 + $0x10] sm:$0xf]
        %v963 = vld [vmem:[%s707 + $0x14] sm:$0xf]
        %v964 = vld [vmem:[%s707 + $0x18] sm:$0xf]
        %v965 = vld [vmem:[%s707 + $0x1c] sm:$0xf]
        %v966 = vld [vmem:[%s707 + $0x20] sm:$0xf]
        %v967 = vld [vmem:[%s707 + $0x24] sm:$0xf]
        %v968 = vld [vmem:[%s707 + $0x28] sm:$0xf]
        %v969 = vld [vmem:[%s707 + $0x2c] sm:$0xf]
        %v970 = vld [vmem:[%s707 + $0x30] sm:$0xf]
        %v971 = vld [vmem:[%s707 + $0x34] sm:$0xf]
        %v972 = vld [vmem:[%s707 + $0x38] sm:$0xf]
        %v973 = vld [vmem:[%s707 + $0x3c] sm:$0xf]
        %v974 = vpack.c.bf16 %v926, %v926
        %v975 = vpack.c.bf16 %v940, %v940
        %v976 = vpack.c.bf16 %v954, %v954
        %v977 = vperm.slane %v746, 0
        %vm978 = vcmask 261120
        %v980 = vsel %vm978, %v974, 0
        %v983 = vsel %vm978, %v975, 0
        %985 = vmatpush.bf16.xpose.msra.mxu0 0
        %986 = vmatpush.bf16.xpose.msra.mxu0 0
        %987 = vmatpush.bf16.xpose.msra.mxu0 0
        %988 = vmatpush.bf16.xpose.msra.mxu0 0
        %989 = vmatpush.bf16.xpose.msra.mxu0 0
        %990 = vmatpush.bf16.xpose.msra.mxu0 0
        %991 = vmatpush.bf16.xpose.msra.mxu0 0
        %992 = vmatpush.bf16.xpose.msra.mxu0 %v983
        %993 = vmatmul.bf16.gmra.mxu0 %v980
        %v994 = vpop.f32.mrf.mxu0
        %v995 = vadd.f32 %v977, %v994
        %v996 = vpop.f32.mrf.mxu0
        %997 = vdwg.mxu0
        %vm998 = vcmask 64512
        %v999 = vsel %vm998, %v995, -inf
        %1000 = vmax.xlane.f32.xlu0 %v999
        %v1001 = vpop.xlane.xlu0 %1000
        %v1002 = vsub.f32 %v995, %v1001
        %v1003 = vmul.f32 %v1002, 1.442695
        %v1004 = vpow.pop %v1003
        %v1005 = vsel %vm998, %v1004, 0.0
        %1006 = vadd.xlane.f32.xlu0 %v1005
        %v1007 = vpop.xlane.xlu0 %1006
        %v1008 = vrcp.pop %v1007
        %v1009 = vmul.f32 %v1004, %v1008
        %v1010 = vpack.c.bf16 %v1009, %v1009
        %v1012 = vsel %vm998, %v1010, 0
        %vm1014 = vcmask 1043456
        %v1016 = vsel %vm1014, %v976, 0
        %1018 = vmatpush.bf16.msra.mxu0 0
        %1019 = vmatpush.bf16.msra.mxu0 0
        %1020 = vmatpush.bf16.msra.mxu0 0
        %1021 = vmatpush.bf16.msra.mxu0 0
        %1022 = vmatpush.bf16.msra.mxu0 0
        %1023 = vmatpush.bf16.msra.mxu0 0
        %1024 = vmatpush.bf16.msra.mxu0 0
        %1025 = vmatpush.bf16.msra.mxu0 %v1016
        %1026 = vmatmul.bf16.gmra.mxu0 %v1012
        %v1027 = vpop.f32.mrf.mxu0
        %v1028 = vadd.f32 0.0, %v1027
        %v1029 = vpop.f32.mrf.mxu0
        %1030 = vdwg.mxu0
        %v1031 = vpack.c.bf16 %v1028, %v1028
        %1033 = vrot.lane.b32.xlu0 %v974, 96
        %v1034 = vpop.permute.xlu0 %1033
        %1036 = vrot.lane.b32.xlu0 %v975, 96
        %v1037 = vpop.permute.xlu0 %1036
        %v1039 = vsel %vm978, %v1034, 0
        %v1042 = vsel %vm978, %v1037, 0
        %1044 = vmatpush.bf16.xpose.msra.mxu0 0
        %1045 = vmatpush.bf16.xpose.msra.mxu0 0
        %1046 = vmatpush.bf16.xpose.msra.mxu0 0
        %1047 = vmatpush.bf16.xpose.msra.mxu0 0
        %1048 = vmatpush.bf16.xpose.msra.mxu0 0
        %1049 = vmatpush.bf16.xpose.msra.mxu0 0
        %1050 = vmatpush.bf16.xpose.msra.mxu0 0
        %1051 = vmatpush.bf16.xpose.msra.mxu0 %v1042
        %1052 = vmatmul.bf16.gmra.mxu0 %v1039
        %v1053 = vpop.f32.mrf.mxu0
        %v1054 = vadd.f32 %v977, %v1053
        %v1055 = vpop.f32.mrf.mxu0
        %1056 = vdwg.mxu0
        %v1057 = vsel %vm998, %v1054, -inf
        %1058 = vmax.xlane.f32.xlu0 %v1057
        %v1059 = vpop.xlane.xlu0 %1058
        %v1060 = vsub.f32 %v1054, %v1059
        %v1061 = vmul.f32 %v1060, 1.442695
        %v1062 = vpow.pop %v1061
        %v1063 = vsel %vm998, %v1062, 0.0
        %1064 = vadd.xlane.f32.xlu0 %v1063
        %v1065 = vpop.xlane.xlu0 %1064
        %v1066 = vrcp.pop %v1065
        %v1067 = vmul.f32 %v1062, %v1066
        %v1068 = vpack.c.bf16 %v1067, %v1067
        %1070 = vrot.lane.b32.xlu0 %v976, 96
        %v1071 = vpop.permute.xlu0 %1070
        %v1073 = vsel %vm998, %v1068, 0
        %v1076 = vsel %vm1014, %v1071, 0
        %1078 = vmatpush.bf16.msra.mxu0 0
        %1079 = vmatpush.bf16.msra.mxu0 0
        %1080 = vmatpush.bf16.msra.mxu0 0
        %1081 = vmatpush.bf16.msra.mxu0 0
        %1082 = vmatpush.bf16.msra.mxu0 0
        %1083 = vmatpush.bf16.msra.mxu0 0
        %1084 = vmatpush.bf16.msra.mxu0 0
        %1085 = vmatpush.bf16.msra.mxu0 %v1076
        %1086 = vmatmul.bf16.gmra.mxu0 %v1073
        %v1087 = vpop.f32.mrf.mxu0
        %v1088 = vadd.f32 0.0, %v1087
        %v1089 = vpop.f32.mrf.mxu0
        %1090 = vdwg.mxu0
        %v1091 = vpack.c.bf16 %v1088, %v1088
        %v1096 = vunpack.c.l.b16 %v962
        %v1097 = vunpack.c.l.b16 %v963
        %v1098 = vunpack.c.l.b16 %v964
        %v1099 = vunpack.c.l.b16 %v965
        %v1100 = vpack.c.b16 %v1097, %v1096
        %v1101 = vpack.c.b16 %v1099, %v1098
        %v1105 = vsel %vm978, %v1091, 0
        %1107 = vmatpush.bf16.msra.mxu0 0
        %1108 = vmatpush.bf16.msra.mxu0 0
        %1109 = vmatpush.bf16.msra.mxu0 0
        %1110 = vmatpush.bf16.msra.mxu0 0
        %1111 = vmatpush.bf16.msra.mxu0 0
        %1112 = vmatpush.bf16.msra.mxu0 0
        %1113 = vmatpush.bf16.msra.mxu0 %v1101
        %1114 = vmatpush.bf16.msra.mxu0 %v1100
        %1115 = vmatmul.bf16.gmra.mxu0 %v1105
        %v1116 = vpop.f32.mrf.mxu0
        %v1117 = vadd.f32 0.0, %v1116
        %v1118 = vpop.f32.mrf.mxu0
        %1119 = vdwg.mxu0
        %v1124 = vunpack.c.l.b16 %v958
        %v1125 = vunpack.c.l.b16 %v959
        %v1126 = vunpack.c.l.b16 %v960
        %v1127 = vunpack.c.l.b16 %v961
        %v1128 = vpack.c.b16 %v1125, %v1124
        %v1129 = vpack.c.b16 %v1127, %v1126
        %v1133 = vsel %vm978, %v1031, 0
        %1135 = vmatpush.bf16.msra.mxu0 0
        %1136 = vmatpush.bf16.msra.mxu0 0
        %1137 = vmatpush.bf16.msra.mxu0 0
        %1138 = vmatpush.bf16.msra.mxu0 0
        %1139 = vmatpush.bf16.msra.mxu0 0
        %1140 = vmatpush.bf16.msra.mxu0 0
        %1141 = vmatpush.bf16.msra.mxu0 %v1129
        %1142 = vmatpush.bf16.msra.mxu0 %v1128
        %1143 = vmatmul.bf16.gmra.mxu0 %v1133
        %v1144 = vpop.f32.mrf.mxu0
        %v1145 = vadd.f32 %v1117, %v1144
        %v1146 = vpop.f32.mrf.mxu0
        %1147 = vdwg.mxu0
        %1148 = vrot.lane.b32.xlu0 %v974, 64
        %v1149 = vpop.permute.xlu0 %1148
        %1150 = vrot.lane.b32.xlu0 %v975, 64
        %v1151 = vpop.permute.xlu0 %1150
        %v1153 = vsel %vm978, %v1149, 0
        %v1156 = vsel %vm978, %v1151, 0
        %1158 = vmatpush.bf16.xpose.msra.mxu0 0
        %1159 = vmatpush.bf16.xpose.msra.mxu0 0
        %1160 = vmatpush.bf16.xpose.msra.mxu0 0
        %1161 = vmatpush.bf16.xpose.msra.mxu0 0
        %1162 = vmatpush.bf16.xpose.msra.mxu0 0
        %1163 = vmatpush.bf16.xpose.msra.mxu0 0
        %1164 = vmatpush.bf16.xpose.msra.mxu0 0
        %1165 = vmatpush.bf16.xpose.msra.mxu0 %v1156
        %1166 = vmatmul.bf16.gmra.mxu0 %v1153
        %v1167 = vpop.f32.mrf.mxu0
        %v1168 = vadd.f32 %v977, %v1167
        %v1169 = vpop.f32.mrf.mxu0
        %1170 = vdwg.mxu0
        %v1171 = vsel %vm998, %v1168, -inf
        %1172 = vmax.xlane.f32.xlu0 %v1171
        %v1173 = vpop.xlane.xlu0 %1172
        %v1174 = vsub.f32 %v1168, %v1173
        %v1175 = vmul.f32 %v1174, 1.442695
        %v1176 = vpow.pop %v1175
        %v1177 = vsel %vm998, %v1176, 0.0
        %1178 = vadd.xlane.f32.xlu0 %v1177
        %v1179 = vpop.xlane.xlu0 %1178
        %v1180 = vrcp.pop %v1179
        %v1181 = vmul.f32 %v1176, %v1180
        %v1182 = vpack.c.bf16 %v1181, %v1181
        %1183 = vrot.lane.b32.xlu0 %v976, 64
        %v1184 = vpop.permute.xlu0 %1183
        %v1186 = vsel %vm998, %v1182, 0
        %v1189 = vsel %vm1014, %v1184, 0
        %1191 = vmatpush.bf16.msra.mxu0 0
        %1192 = vmatpush.bf16.msra.mxu0 0
        %1193 = vmatpush.bf16.msra.mxu0 0
        %1194 = vmatpush.bf16.msra.mxu0 0
        %1195 = vmatpush.bf16.msra.mxu0 0
        %1196 = vmatpush.bf16.msra.mxu0 0
        %1197 = vmatpush.bf16.msra.mxu0 0
        %1198 = vmatpush.bf16.msra.mxu0 %v1189
        %1199 = vmatmul.bf16.gmra.mxu0 %v1186
        %v1200 = vpop.f32.mrf.mxu0
        %v1201 = vadd.f32 0.0, %v1200
        %v1202 = vpop.f32.mrf.mxu0
        %1203 = vdwg.mxu0
        %v1204 = vpack.c.bf16 %v1201, %v1201
        %v1209 = vunpack.c.l.b16 %v966
        %v1210 = vunpack.c.l.b16 %v967
        %v1211 = vunpack.c.l.b16 %v968
        %v1212 = vunpack.c.l.b16 %v969
        %v1213 = vpack.c.b16 %v1210, %v1209
        %v1214 = vpack.c.b16 %v1212, %v1211
        %v1218 = vsel %vm978, %v1204, 0
        %1220 = vmatpush.bf16.msra.mxu0 0
        %1221 = vmatpush.bf16.msra.mxu0 0
        %1222 = vmatpush.bf16.msra.mxu0 0
        %1223 = vmatpush.bf16.msra.mxu0 0
        %1224 = vmatpush.bf16.msra.mxu0 0
        %1225 = vmatpush.bf16.msra.mxu0 0
        %1226 = vmatpush.bf16.msra.mxu0 %v1214
        %1227 = vmatpush.bf16.msra.mxu0 %v1213
        %1228 = vmatmul.bf16.gmra.mxu0 %v1218
        %v1229 = vpop.f32.mrf.mxu0
        %v1230 = vadd.f32 0.0, %v1229
        %v1231 = vpop.f32.mrf.mxu0
        %1232 = vdwg.mxu0
        %v1233 = vadd.f32 %v1145, %v1230
        %1234 = vrot.lane.b32.xlu0 %v974, 32
        %v1235 = vpop.permute.xlu0 %1234
        %1236 = vrot.lane.b32.xlu0 %v975, 32
        %v1237 = vpop.permute.xlu0 %1236
        %v1239 = vsel %vm978, %v1235, 0
        %v1242 = vsel %vm978, %v1237, 0
        %1244 = vmatpush.bf16.xpose.msra.mxu0 0
        %1245 = vmatpush.bf16.xpose.msra.mxu0 0
        %1246 = vmatpush.bf16.xpose.msra.mxu0 0
        %1247 = vmatpush.bf16.xpose.msra.mxu0 0
        %1248 = vmatpush.bf16.xpose.msra.mxu0 0
        %1249 = vmatpush.bf16.xpose.msra.mxu0 0
        %1250 = vmatpush.bf16.xpose.msra.mxu0 0
        %1251 = vmatpush.bf16.xpose.msra.mxu0 %v1242
        %1252 = vmatmul.bf16.gmra.mxu0 %v1239
        %v1253 = vpop.f32.mrf.mxu0
        %v1254 = vadd.f32 %v977, %v1253
        %v1255 = vpop.f32.mrf.mxu0
        %1256 = vdwg.mxu0
        %v1257 = vsel %vm998, %v1254, -inf
        %1258 = vmax.xlane.f32.xlu0 %v1257
        %v1259 = vpop.xlane.xlu0 %1258
        %v1260 = vsub.f32 %v1254, %v1259
        %v1261 = vmul.f32 %v1260, 1.442695
        %v1262 = vpow.pop %v1261
        %v1263 = vsel %vm998, %v1262, 0.0
        %1264 = vadd.xlane.f32.xlu0 %v1263
        %v1265 = vpop.xlane.xlu0 %1264
        %v1266 = vrcp.pop %v1265
        %v1267 = vmul.f32 %v1262, %v1266
        %v1268 = vpack.c.bf16 %v1267, %v1267
        %1269 = vrot.lane.b32.xlu0 %v976, 32
        %v1270 = vpop.permute.xlu0 %1269
        %v1272 = vsel %vm998, %v1268, 0
        %v1275 = vsel %vm1014, %v1270, 0
        %1277 = vmatpush.bf16.msra.mxu0 0
        %1278 = vmatpush.bf16.msra.mxu0 0
        %1279 = vmatpush.bf16.msra.mxu0 0
        %1280 = vmatpush.bf16.msra.mxu0 0
        %1281 = vmatpush.bf16.msra.mxu0 0
        %1282 = vmatpush.bf16.msra.mxu0 0
        %1283 = vmatpush.bf16.msra.mxu0 0
        %1284 = vmatpush.bf16.msra.mxu0 %v1275
        %1285 = vmatmul.bf16.gmra.mxu0 %v1272
        %v1286 = vpop.f32.mrf.mxu0
        %v1287 = vadd.f32 0.0, %v1286
        %v1288 = vpop.f32.mrf.mxu0
        %1289 = vdwg.mxu0
        %v1290 = vpack.c.bf16 %v1287, %v1287
        %v1295 = vunpack.c.l.b16 %v970
        %v1296 = vunpack.c.l.b16 %v971
        %v1297 = vunpack.c.l.b16 %v972
        %v1298 = vunpack.c.l.b16 %v973
        %v1299 = vpack.c.b16 %v1296, %v1295
        %v1300 = vpack.c.b16 %v1298, %v1297
        %v1304 = vsel %vm978, %v1290, 0
        %1306 = vmatpush.bf16.msra.mxu0 0
        %1307 = vmatpush.bf16.msra.mxu0 0
        %1308 = vmatpush.bf16.msra.mxu0 0
        %1309 = vmatpush.bf16.msra.mxu0 0
        %1310 = vmatpush.bf16.msra.mxu0 0
        %1311 = vmatpush.bf16.msra.mxu0 0
        %1312 = vmatpush.bf16.msra.mxu0 %v1300
        %1313 = vmatpush.bf16.msra.mxu0 %v1299
        %1314 = vmatmul.bf16.gmra.mxu0 %v1304
        %v1315 = vpop.f32.mrf.mxu0
        %v1316 = vadd.f32 0.0, %v1315
        %v1317 = vpop.f32.mrf.mxu0
        %1318 = vdwg.mxu0
        %v1319 = vadd.f32 %v1233, %v1316
        %v1320 = vpack.c.bf16 %v928, %v928
        %v1321 = vpack.c.bf16 %v942, %v942
        %v1322 = vpack.c.bf16 %v956, %v956
        %v1323 = vperm.slane %v746, 1
        %v1325 = vsel %vm978, %v1320, 0
        %v1328 = vsel %vm978, %v1321, 0
        %1330 = vmatpush.bf16.xpose.msra.mxu0 0
        %1331 = vmatpush.bf16.xpose.msra.mxu0 0
        %1332 = vmatpush.bf16.xpose.msra.mxu0 0
        %1333 = vmatpush.bf16.xpose.msra.mxu0 0
        %1334 = vmatpush.bf16.xpose.msra.mxu0 0
        %1335 = vmatpush.bf16.xpose.msra.mxu0 0
        %1336 = vmatpush.bf16.xpose.msra.mxu0 0
        %1337 = vmatpush.bf16.xpose.msra.mxu0 %v1328
        %1338 = vmatmul.bf16.gmra.mxu0 %v1325
        %v1339 = vpop.f32.mrf.mxu0
        %v1340 = vadd.f32 %v1323, %v1339
        %v1341 = vpop.f32.mrf.mxu0
        %1342 = vdwg.mxu0
        %v1343 = vsel %vm998, %v1340, -inf
        %1344 = vmax.xlane.f32.xlu0 %v1343
        %v1345 = vpop.xlane.xlu0 %1344
        %v1346 = vsub.f32 %v1340, %v1345
        %v1347 = vmul.f32 %v1346, 1.442695
        %v1348 = vpow.pop %v1347
        %v1349 = vsel %vm998, %v1348, 0.0
        %1350 = vadd.xlane.f32.xlu0 %v1349
        %v1351 = vpop.xlane.xlu0 %1350
        %v1352 = vrcp.pop %v1351
        %v1353 = vmul.f32 %v1348, %v1352
        %v1354 = vpack.c.bf16 %v1353, %v1353
        %v1356 = vsel %vm998, %v1354, 0
        %v1359 = vsel %vm1014, %v1322, 0
        %1361 = vmatpush.bf16.msra.mxu0 0
        %1362 = vmatpush.bf16.msra.mxu0 0
        %1363 = vmatpush.bf16.msra.mxu0 0
        %1364 = vmatpush.bf16.msra.mxu0 0
        %1365 = vmatpush.bf16.msra.mxu0 0
        %1366 = vmatpush.bf16.msra.mxu0 0
        %1367 = vmatpush.bf16.msra.mxu0 0
        %1368 = vmatpush.bf16.msra.mxu0 %v1359
        %1369 = vmatmul.bf16.gmra.mxu0 %v1356
        %v1370 = vpop.f32.mrf.mxu0
        %v1371 = vadd.f32 0.0, %v1370
        %v1372 = vpop.f32.mrf.mxu0
        %1373 = vdwg.mxu0
        %v1374 = vpack.c.bf16 %v1371, %v1371
        %1376 = vrot.lane.b32.xlu0 %v1320, 96
        %v1377 = vpop.permute.xlu0 %1376
        %1379 = vrot.lane.b32.xlu0 %v1321, 96
        %v1380 = vpop.permute.xlu0 %1379
        %v1382 = vsel %vm978, %v1377, 0
        %v1385 = vsel %vm978, %v1380, 0
        %1387 = vmatpush.bf16.xpose.msra.mxu0 0
        %1388 = vmatpush.bf16.xpose.msra.mxu0 0
        %1389 = vmatpush.bf16.xpose.msra.mxu0 0
        %1390 = vmatpush.bf16.xpose.msra.mxu0 0
        %1391 = vmatpush.bf16.xpose.msra.mxu0 0
        %1392 = vmatpush.bf16.xpose.msra.mxu0 0
        %1393 = vmatpush.bf16.xpose.msra.mxu0 0
        %1394 = vmatpush.bf16.xpose.msra.mxu0 %v1385
        %1395 = vmatmul.bf16.gmra.mxu0 %v1382
        %v1396 = vpop.f32.mrf.mxu0
        %v1397 = vadd.f32 %v1323, %v1396
        %v1398 = vpop.f32.mrf.mxu0
        %1399 = vdwg.mxu0
        %v1400 = vsel %vm998, %v1397, -inf
        %1401 = vmax.xlane.f32.xlu0 %v1400
        %v1402 = vpop.xlane.xlu0 %1401
        %v1403 = vsub.f32 %v1397, %v1402
        %v1404 = vmul.f32 %v1403, 1.442695
        %v1405 = vpow.pop %v1404
        %v1406 = vsel %vm998, %v1405, 0.0
        %1407 = vadd.xlane.f32.xlu0 %v1406
        %v1408 = vpop.xlane.xlu0 %1407
        %v1409 = vrcp.pop %v1408
        %v1410 = vmul.f32 %v1405, %v1409
        %v1411 = vpack.c.bf16 %v1410, %v1410
        %1413 = vrot.lane.b32.xlu0 %v1322, 96
        %v1414 = vpop.permute.xlu0 %1413
        %v1416 = vsel %vm998, %v1411, 0
        %v1419 = vsel %vm1014, %v1414, 0
        %1421 = vmatpush.bf16.msra.mxu0 0
        %1422 = vmatpush.bf16.msra.mxu0 0
        %1423 = vmatpush.bf16.msra.mxu0 0
        %1424 = vmatpush.bf16.msra.mxu0 0
        %1425 = vmatpush.bf16.msra.mxu0 0
        %1426 = vmatpush.bf16.msra.mxu0 0
        %1427 = vmatpush.bf16.msra.mxu0 0
        %1428 = vmatpush.bf16.msra.mxu0 %v1419
        %1429 = vmatmul.bf16.gmra.mxu0 %v1416
        %v1430 = vpop.f32.mrf.mxu0
        %v1431 = vadd.f32 0.0, %v1430
        %v1432 = vpop.f32.mrf.mxu0
        %1433 = vdwg.mxu0
        %v1434 = vpack.c.bf16 %v1431, %v1431
        %v1436 = vsel %vm978, %v1434, 0
        %1438 = vmatpush.bf16.msra.mxu0 0
        %1439 = vmatpush.bf16.msra.mxu0 0
        %1440 = vmatpush.bf16.msra.mxu0 0
        %1441 = vmatpush.bf16.msra.mxu0 0
        %1442 = vmatpush.bf16.msra.mxu0 0
        %1443 = vmatpush.bf16.msra.mxu0 0
        %1444 = vmatpush.bf16.msra.mxu0 %v1101
        %1445 = vmatpush.bf16.msra.mxu0 %v1100
        %1446 = vmatmul.bf16.gmra.mxu0 %v1436
        %v1447 = vpop.f32.mrf.mxu0
        %v1448 = vadd.f32 0.0, %v1447
        %v1449 = vpop.f32.mrf.mxu0
        %1450 = vdwg.mxu0
        %v1452 = vsel %vm978, %v1374, 0
        %1454 = vmatpush.bf16.msra.mxu0 0
        %1455 = vmatpush.bf16.msra.mxu0 0
        %1456 = vmatpush.bf16.msra.mxu0 0
        %1457 = vmatpush.bf16.msra.mxu0 0
        %1458 = vmatpush.bf16.msra.mxu0 0
        %1459 = vmatpush.bf16.msra.mxu0 0
        %1460 = vmatpush.bf16.msra.mxu0 %v1129
        %1461 = vmatpush.bf16.msra.mxu0 %v1128
        %1462 = vmatmul.bf16.gmra.mxu0 %v1452
        %v1463 = vpop.f32.mrf.mxu0
        %v1464 = vadd.f32 %v1448, %v1463
        %v1465 = vpop.f32.mrf.mxu0
        %1466 = vdwg.mxu0
        %1467 = vrot.lane.b32.xlu0 %v1320, 64
        %v1468 = vpop.permute.xlu0 %1467
        %1469 = vrot.lane.b32.xlu0 %v1321, 64
        %v1470 = vpop.permute.xlu0 %1469
        %v1472 = vsel %vm978, %v1468, 0
        %v1475 = vsel %vm978, %v1470, 0
        %1477 = vmatpush.bf16.xpose.msra.mxu0 0
        %1478 = vmatpush.bf16.xpose.msra.mxu0 0
        %1479 = vmatpush.bf16.xpose.msra.mxu0 0
        %1480 = vmatpush.bf16.xpose.msra.mxu0 0
        %1481 = vmatpush.bf16.xpose.msra.mxu0 0
        %1482 = vmatpush.bf16.xpose.msra.mxu0 0
        %1483 = vmatpush.bf16.xpose.msra.mxu0 0
        %1484 = vmatpush.bf16.xpose.msra.mxu0 %v1475
        %1485 = vmatmul.bf16.gmra.mxu0 %v1472
        %v1486 = vpop.f32.mrf.mxu0
        %v1487 = vadd.f32 %v1323, %v1486
        %v1488 = vpop.f32.mrf.mxu0
        %1489 = vdwg.mxu0
        %v1490 = vsel %vm998, %v1487, -inf
        %1491 = vmax.xlane.f32.xlu0 %v1490
        %v1492 = vpop.xlane.xlu0 %1491
        %v1493 = vsub.f32 %v1487, %v1492
        %v1494 = vmul.f32 %v1493, 1.442695
        %v1495 = vpow.pop %v1494
        %v1496 = vsel %vm998, %v1495, 0.0
        %1497 = vadd.xlane.f32.xlu0 %v1496
        %v1498 = vpop.xlane.xlu0 %1497
        %v1499 = vrcp.pop %v1498
        %v1500 = vmul.f32 %v1495, %v1499
        %v1501 = vpack.c.bf16 %v1500, %v1500
        %1502 = vrot.lane.b32.xlu0 %v1322, 64
        %v1503 = vpop.permute.xlu0 %1502
        %v1505 = vsel %vm998, %v1501, 0
        %v1508 = vsel %vm1014, %v1503, 0
        %1510 = vmatpush.bf16.msra.mxu0 0
        %1511 = vmatpush.bf16.msra.mxu0 0
        %1512 = vmatpush.bf16.msra.mxu0 0
        %1513 = vmatpush.bf16.msra.mxu0 0
        %1514 = vmatpush.bf16.msra.mxu0 0
        %1515 = vmatpush.bf16.msra.mxu0 0
        %1516 = vmatpush.bf16.msra.mxu0 0
        %1517 = vmatpush.bf16.msra.mxu0 %v1508
        %1518 = vmatmul.bf16.gmra.mxu0 %v1505
        %v1519 = vpop.f32.mrf.mxu0
        %v1520 = vadd.f32 0.0, %v1519
        %v1521 = vpop.f32.mrf.mxu0
        %1522 = vdwg.mxu0
        %v1523 = vpack.c.bf16 %v1520, %v1520
        %v1525 = vsel %vm978, %v1523, 0
        %1527 = vmatpush.bf16.msra.mxu0 0
        %1528 = vmatpush.bf16.msra.mxu0 0
        %1529 = vmatpush.bf16.msra.mxu0 0
        %1530 = vmatpush.bf16.msra.mxu0 0
        %1531 = vmatpush.bf16.msra.mxu0 0
        %1532 = vmatpush.bf16.msra.mxu0 0
        %1533 = vmatpush.bf16.msra.mxu0 %v1214
        %1534 = vmatpush.bf16.msra.mxu0 %v1213
        %1535 = vmatmul.bf16.gmra.mxu0 %v1525
        %v1536 = vpop.f32.mrf.mxu0
        %v1537 = vadd.f32 0.0, %v1536
        %v1538 = vpop.f32.mrf.mxu0
        %1539 = vdwg.mxu0
        %v1540 = vadd.f32 %v1464, %v1537
        %1541 = vrot.lane.b32.xlu0 %v1320, 32
        %v1542 = vpop.permute.xlu0 %1541
        %1543 = vrot.lane.b32.xlu0 %v1321, 32
        %v1544 = vpop.permute.xlu0 %1543
        %v1546 = vsel %vm978, %v1542, 0
        %v1549 = vsel %vm978, %v1544, 0
        %1551 = vmatpush.bf16.xpose.msra.mxu0 0
        %1552 = vmatpush.bf16.xpose.msra.mxu0 0
        %1553 = vmatpush.bf16.xpose.msra.mxu0 0
        %1554 = vmatpush.bf16.xpose.msra.mxu0 0
        %1555 = vmatpush.bf16.xpose.msra.mxu0 0
        %1556 = vmatpush.bf16.xpose.msra.mxu0 0
        %1557 = vmatpush.bf16.xpose.msra.mxu0 0
        %1558 = vmatpush.bf16.xpose.msra.mxu0 %v1549
        %1559 = vmatmul.bf16.gmra.mxu0 %v1546
        %v1560 = vpop.f32.mrf.mxu0
        %v1561 = vadd.f32 %v1323, %v1560
        %v1562 = vpop.f32.mrf.mxu0
        %1563 = vdwg.mxu0
        %v1564 = vsel %vm998, %v1561, -inf
        %1565 = vmax.xlane.f32.xlu0 %v1564
        %v1566 = vpop.xlane.xlu0 %1565
        %v1567 = vsub.f32 %v1561, %v1566
        %v1568 = vmul.f32 %v1567, 1.442695
        %v1569 = vpow.pop %v1568
        %v1570 = vsel %vm998, %v1569, 0.0
        %1571 = vadd.xlane.f32.xlu0 %v1570
        %v1572 = vpop.xlane.xlu0 %1571
        %v1573 = vrcp.pop %v1572
        %v1574 = vmul.f32 %v1569, %v1573
        %v1575 = vpack.c.bf16 %v1574, %v1574
        %1576 = vrot.lane.b32.xlu0 %v1322, 32
        %v1577 = vpop.permute.xlu0 %1576
        %v1579 = vsel %vm998, %v1575, 0
        %v1582 = vsel %vm1014, %v1577, 0
        %1584 = vmatpush.bf16.msra.mxu0 0
        %1585 = vmatpush.bf16.msra.mxu0 0
        %1586 = vmatpush.bf16.msra.mxu0 0
        %1587 = vmatpush.bf16.msra.mxu0 0
        %1588 = vmatpush.bf16.msra.mxu0 0
        %1589 = vmatpush.bf16.msra.mxu0 0
        %1590 = vmatpush.bf16.msra.mxu0 0
        %1591 = vmatpush.bf16.msra.mxu0 %v1582
        %1592 = vmatmul.bf16.gmra.mxu0 %v1579
        %v1593 = vpop.f32.mrf.mxu0
        %v1594 = vadd.f32 0.0, %v1593
        %v1595 = vpop.f32.mrf.mxu0
        %1596 = vdwg.mxu0
        %v1597 = vpack.c.bf16 %v1594, %v1594
        %v1599 = vsel %vm978, %v1597, 0
        %1601 = vmatpush.bf16.msra.mxu0 0
        %1602 = vmatpush.bf16.msra.mxu0 0
        %1603 = vmatpush.bf16.msra.mxu0 0
        %1604 = vmatpush.bf16.msra.mxu0 0
        %1605 = vmatpush.bf16.msra.mxu0 0
        %1606 = vmatpush.bf16.msra.mxu0 0
        %1607 = vmatpush.bf16.msra.mxu0 %v1300
        %1608 = vmatpush.bf16.msra.mxu0 %v1299
        %1609 = vmatmul.bf16.gmra.mxu0 %v1599
        %v1610 = vpop.f32.mrf.mxu0
        %v1611 = vadd.f32 0.0, %v1610
        %v1612 = vpop.f32.mrf.mxu0
        %1613 = vdwg.mxu0
        %v1614 = vadd.f32 %v1540, %v1611
        %1615 = vst.msk [vmem:[%s734] sm:$0xff] %vm998, %v1009
        %1616 = vst.msk [vmem:[%s734 + $0x8] sm:$0xff] %vm998, %v1067
        %1617 = vst.msk [vmem:[%s734 + $0x10] sm:$0xff] %vm998, %v1181
        %1618 = vst.msk [vmem:[%s734 + $0x18] sm:$0xff] %vm998, %v1267
        %1619 = vst.msk [vmem:[%s734 + $0x20] sm:$0xff] %vm998, %v1353
        %1620 = vst.msk [vmem:[%s734 + $0x28] sm:$0xff] %vm998, %v1410
        %1621 = vst.msk [vmem:[%s734 + $0x30] sm:$0xff] %vm998, %v1500
        %1622 = vst.msk [vmem:[%s734 + $0x38] sm:$0xff] %vm998, %v1574
        %v1623 = vld [vmem:[%s710] sm:$0x1]
        %v1625 = vperm.slane %v1623, 0
        %v1627 = vadd.f32 %v1319, %v1625
        %v1628 = vadd.f32 %v1614, %v1625
        %v1629 = vadd.f32 %v1627, %v744
        %v1630 = vadd.f32 %v1628, %v745
        %v1631 = vld [vmem:[%s713] sm:$0x1]
        %v1632 = vld [vmem:[%s716] sm:$0x1]
        %1633 = vadd.xlane.f32.xlu0 %v1629
        %v1634 = vpop.xlane.xlu0 %1633
        %1635 = vadd.xlane.f32.xlu0 %v1630
        %v1636 = vpop.xlane.xlu0 %1635
        %v1637 = vrcp.pop 128.0
        %v1638 = vmul.f32 128.0, %v1637
        %v1639 = vsub.f32 1.0, %v1638
        %v1640 = vmul.f32 %v1637, %v1639
        %v1641 = vadd.f32 %v1637, %v1640
        %vm1642 = vweird.f32 %v1637
        %v1643 = vsel %vm1642, %v1637, %v1641
        %v1644 = vmul.f32 %v1634, %v1643
        %v1645 = vmul.f32 %v1636, %v1643
        %v1646 = vsub.f32 %v1629, %v1644
        %v1647 = vsub.f32 %v1630, %v1645
        %v1648 = vmul.f32 %v1646, %v1646
        %v1649 = vmul.f32 %v1647, %v1647
        %1650 = vadd.xlane.f32.xlu0 %v1648
        %v1651 = vpop.xlane.xlu0 %1650
        %1652 = vadd.xlane.f32.xlu0 %v1649
        %v1653 = vpop.xlane.xlu0 %1652
        %v1654 = vmul.f32 %v1651, %v1643
        %v1655 = vmul.f32 %v1653, %v1643
        %v1656 = vadd.f32 %v1654, 1e-05
        %v1657 = vadd.f32 %v1655, 1e-05
        %v1658 = vrsqrt.pop %v1656
        %v1659 = vmul.f32 %v1658, %v1656
        %v1660 = vmul.f32 %v1659, %v1658
        %v1661 = vmul.f32 0.5, %v1660
        %v1662 = vsub.f32 1.5, %v1661
        %v1663 = vmul.f32 %v1658, %v1662
        %vm1664 = vweird.f32 %v1656
        %vm1665 = vweird.f32 %v1658
        %vm1666 = vmor %vm1664, %vm1665
        %v1667 = vsel %vm1666, %v1658, %v1663
        %v1668 = vrsqrt.pop %v1657
        %v1669 = vmul.f32 %v1668, %v1657
        %v1670 = vmul.f32 %v1669, %v1668
        %v1671 = vmul.f32 0.5, %v1670
        %v1672 = vsub.f32 1.5, %v1671
        %v1673 = vmul.f32 %v1668, %v1672
        %vm1674 = vweird.f32 %v1657
        %vm1675 = vweird.f32 %v1668
        %vm1676 = vmor %vm1674, %vm1675
        %v1677 = vsel %vm1676, %v1668, %v1673
        %v1678 = vmul.f32 %v1646, %v1667
        %v1679 = vmul.f32 %v1647, %v1677
        %v1681 = vperm.slane %v1631, 0
        %v1683 = vmul.f32 %v1678, %v1681
        %v1684 = vmul.f32 %v1679, %v1681
        %v1686 = vperm.slane %v1632, 0
        %v1688 = vadd.f32 %v1683, %v1686
        %v1689 = vadd.f32 %v1684, %v1686
        %v1690 = vpack.c.bf16 %v1689, %v1688
        %v1691 = vld [vmem:[%s600] sm:$0xff]
        %v1692 = vld [vmem:[%s600 + $0x8] sm:$0xff]
        %v1693 = vld [vmem:[%s600 + $0x10] sm:$0xff]
        %v1694 = vld [vmem:[%s600 + $0x18] sm:$0xff]
        %v1695 = vld [vmem:[%s600 + $0x20] sm:$0xff]
        %v1696 = vld [vmem:[%s600 + $0x28] sm:$0xff]
        %v1697 = vld [vmem:[%s600 + $0x30] sm:$0xff]
        %v1698 = vld [vmem:[%s600 + $0x38] sm:$0xff]
        %v1699 = vld [vmem:[%s600 + $0x40] sm:$0xff]
        %v1700 = vld [vmem:[%s600 + $0x48] sm:$0xff]
        %v1701 = vld [vmem:[%s600 + $0x50] sm:$0xff]
        %v1702 = vld [vmem:[%s600 + $0x58] sm:$0xff]
        %v1703 = vld [vmem:[%s600 + $0x60] sm:$0xff]
        %v1704 = vld [vmem:[%s600 + $0x68] sm:$0xff]
        %v1705 = vld [vmem:[%s600 + $0x70] sm:$0xff]
        %v1706 = vld [vmem:[%s600 + $0x78] sm:$0xff]
        %v1707 = vld [vmem:[%s720] sm:$0x3]
        %v1709 = vperm.slane %v1707, 0
        %v1710 = vperm.slane %v1707, 1
        %v1729 = vunpack.c.l.b16 %v1691
        %v1730 = vunpack.c.h.b16 %v1691
        %v1731 = vunpack.c.l.b16 %v1692
        %v1732 = vunpack.c.h.b16 %v1692
        %v1733 = vunpack.c.l.b16 %v1693
        %v1734 = vunpack.c.h.b16 %v1693
        %v1735 = vunpack.c.l.b16 %v1694
        %v1736 = vunpack.c.h.b16 %v1694
        %v1737 = vunpack.c.l.b16 %v1695
        %v1738 = vunpack.c.h.b16 %v1695
        %v1739 = vunpack.c.l.b16 %v1696
        %v1740 = vunpack.c.h.b16 %v1696
        %v1741 = vunpack.c.l.b16 %v1697
        %v1742 = vunpack.c.h.b16 %v1697
        %v1743 = vunpack.c.l.b16 %v1698
        %v1744 = vunpack.c.h.b16 %v1698
        %v1745 = vunpack.c.l.b16 %v1699
        %v1746 = vunpack.c.h.b16 %v1699
        %v1747 = vunpack.c.l.b16 %v1700
        %v1748 = vunpack.c.h.b16 %v1700
        %v1749 = vunpack.c.l.b16 %v1701
        %v1750 = vunpack.c.h.b16 %v1701
        %v1751 = vunpack.c.l.b16 %v1702
        %v1752 = vunpack.c.h.b16 %v1702
        %v1753 = vunpack.c.l.b16 %v1703
        %v1754 = vunpack.c.h.b16 %v1703
        %v1755 = vunpack.c.l.b16 %v1704
        %v1756 = vunpack.c.h.b16 %v1704
        %v1757 = vunpack.c.l.b16 %v1705
        %v1758 = vunpack.c.h.b16 %v1705
        %v1759 = vunpack.c.l.b16 %v1706
        %v1760 = vunpack.c.h.b16 %v1706
        %v1761 = vpack.c.b16 %v1731, %v1729
        %v1762 = vpack.c.b16 %v1732, %v1730
        %v1763 = vpack.c.b16 %v1735, %v1733
        %v1764 = vpack.c.b16 %v1736, %v1734
        %v1765 = vpack.c.b16 %v1739, %v1737
        %v1766 = vpack.c.b16 %v1740, %v1738
        %v1767 = vpack.c.b16 %v1743, %v1741
        %v1768 = vpack.c.b16 %v1744, %v1742
        %v1769 = vpack.c.b16 %v1747, %v1745
        %v1770 = vpack.c.b16 %v1748, %v1746
        %v1771 = vpack.c.b16 %v1751, %v1749
        %v1772 = vpack.c.b16 %v1752, %v1750
        %v1773 = vpack.c.b16 %v1755, %v1753
        %v1774 = vpack.c.b16 %v1756, %v1754
        %v1775 = vpack.c.b16 %v1759, %v1757
        %v1776 = vpack.c.b16 %v1760, %v1758
        %1793 = vmatpush.bf16.msra.mxu0 %v1775
        %1794 = vmatpush.bf16.msra.mxu0 %v1773
        %1795 = vmatpush.bf16.msra.mxu0 %v1771
        %1796 = vmatpush.bf16.msra.mxu0 %v1769
        %1797 = vmatpush.bf16.msra.mxu0 %v1767
        %1798 = vmatpush.bf16.msra.mxu0 %v1765
        %1799 = vmatpush.bf16.msra.mxu0 %v1763
        %1800 = vmatpush.bf16.msra.mxu0 %v1761
        %1801 = vmatmul.bf16.gmra.mxu0 %v1690
        %v1802 = vpop.f32.mrf.mxu0
        %v1803 = vadd.f32 %v1709, %v1802
        %v1804 = vpop.f32.mrf.mxu0
        %v1805 = vadd.f32 %v1709, %v1804
        %1806 = vdwg.mxu0
        %1807 = vmatpush.bf16.msra.mxu0 %v1776
        %1808 = vmatpush.bf16.msra.mxu0 %v1774
        %1809 = vmatpush.bf16.msra.mxu0 %v1772
        %1810 = vmatpush.bf16.msra.mxu0 %v1770
        %1811 = vmatpush.bf16.msra.mxu0 %v1768
        %1812 = vmatpush.bf16.msra.mxu0 %v1766
        %1813 = vmatpush.bf16.msra.mxu0 %v1764
        %1814 = vmatpush.bf16.msra.mxu0 %v1762
        %1815 = vmatmul.bf16.gmra.mxu0 %v1690
        %v1816 = vpop.f32.mrf.mxu0
        %v1817 = vadd.f32 %v1710, %v1816
        %v1818 = vpop.f32.mrf.mxu0
        %v1819 = vadd.f32 %v1710, %v1818
        %1820 = vdwg.mxu0
        %v1821 = vmax.f32 %v1803, 0.0
        %v1822 = vmax.f32 %v1817, 0.0
        %v1823 = vmax.f32 %v1805, 0.0
        %v1824 = vmax.f32 %v1819, 0.0
        %v1825 = vpack.c.bf16 %v1823, %v1821
        %v1826 = vpack.c.bf16 %v1824, %v1822
        %v1827 = vld [vmem:[%s610] sm:$0xf]
        %v1828 = vld [vmem:[%s610 + $0x4] sm:$0xf]
        %v1829 = vld [vmem:[%s610 + $0x8] sm:$0xf]
        %v1830 = vld [vmem:[%s610 + $0xc] sm:$0xf]
        %v1831 = vld [vmem:[%s610 + $0x10] sm:$0xf]
        %v1832 = vld [vmem:[%s610 + $0x14] sm:$0xf]
        %v1833 = vld [vmem:[%s610 + $0x18] sm:$0xf]
        %v1834 = vld [vmem:[%s610 + $0x1c] sm:$0xf]
        %v1835 = vld [vmem:[%s610 + $0x20] sm:$0xf]
        %v1836 = vld [vmem:[%s610 + $0x24] sm:$0xf]
        %v1837 = vld [vmem:[%s610 + $0x28] sm:$0xf]
        %v1838 = vld [vmem:[%s610 + $0x2c] sm:$0xf]
        %v1839 = vld [vmem:[%s610 + $0x30] sm:$0xf]
        %v1840 = vld [vmem:[%s610 + $0x34] sm:$0xf]
        %v1841 = vld [vmem:[%s610 + $0x38] sm:$0xf]
        %v1842 = vld [vmem:[%s610 + $0x3c] sm:$0xf]
        %v1843 = vld [vmem:[%s610 + $0x40] sm:$0xf]
        %v1844 = vld [vmem:[%s610 + $0x44] sm:$0xf]
        %v1845 = vld [vmem:[%s610 + $0x48] sm:$0xf]
        %v1846 = vld [vmem:[%s610 + $0x4c] sm:$0xf]
        %v1847 = vld [vmem:[%s610 + $0x50] sm:$0xf]
        %v1848 = vld [vmem:[%s610 + $0x54] sm:$0xf]
        %v1849 = vld [vmem:[%s610 + $0x58] sm:$0xf]
        %v1850 = vld [vmem:[%s610 + $0x5c] sm:$0xf]
        %v1851 = vld [vmem:[%s610 + $0x60] sm:$0xf]
        %v1852 = vld [vmem:[%s610 + $0x64] sm:$0xf]
        %v1853 = vld [vmem:[%s610 + $0x68] sm:$0xf]
        %v1854 = vld [vmem:[%s610 + $0x6c] sm:$0xf]
        %v1855 = vld [vmem:[%s610 + $0x70] sm:$0xf]
        %v1856 = vld [vmem:[%s610 + $0x74] sm:$0xf]
        %v1857 = vld [vmem:[%s610 + $0x78] sm:$0xf]
        %v1858 = vld [vmem:[%s610 + $0x7c] sm:$0xf]
        %v1859 = vld [vmem:[%s723] sm:$0x1]
        %v1861 = vperm.slane %v1859, 0
        %v1895 = vunpack.c.l.b16 %v1827
        %v1896 = vunpack.c.l.b16 %v1828
        %v1897 = vunpack.c.l.b16 %v1829
        %v1898 = vunpack.c.l.b16 %v1830
        %v1899 = vunpack.c.l.b16 %v1831
        %v1900 = vunpack.c.l.b16 %v1832
        %v1901 = vunpack.c.l.b16 %v1833
        %v1902 = vunpack.c.l.b16 %v1834
        %v1903 = vunpack.c.l.b16 %v1835
        %v1904 = vunpack.c.l.b16 %v1836
        %v1905 = vunpack.c.l.b16 %v1837
        %v1906 = vunpack.c.l.b16 %v1838
        %v1907 = vunpack.c.l.b16 %v1839
        %v1908 = vunpack.c.l.b16 %v1840
        %v1909 = vunpack.c.l.b16 %v1841
        %v1910 = vunpack.c.l.b16 %v1842
        %v1911 = vunpack.c.l.b16 %v1843
        %v1912 = vunpack.c.l.b16 %v1844
        %v1913 = vunpack.c.l.b16 %v1845
        %v1914 = vunpack.c.l.b16 %v1846
        %v1915 = vunpack.c.l.b16 %v1847
        %v1916 = vunpack.c.l.b16 %v1848
        %v1917 = vunpack.c.l.b16 %v1849
        %v1918 = vunpack.c.l.b16 %v1850
        %v1919 = vunpack.c.l.b16 %v1851
        %v1920 = vunpack.c.l.b16 %v1852
        %v1921 = vunpack.c.l.b16 %v1853
        %v1922 = vunpack.c.l.b16 %v1854
        %v1923 = vunpack.c.l.b16 %v1855
        %v1924 = vunpack.c.l.b16 %v1856
        %v1925 = vunpack.c.l.b16 %v1857
        %v1926 = vunpack.c.l.b16 %v1858
        %v1927 = vpack.c.b16 %v1896, %v1895
        %v1928 = vpack.c.b16 %v1898, %v1897
        %v1929 = vpack.c.b16 %v1900, %v1899
        %v1930 = vpack.c.b16 %v1902, %v1901
        %v1931 = vpack.c.b16 %v1904, %v1903
        %v1932 = vpack.c.b16 %v1906, %v1905
        %v1933 = vpack.c.b16 %v1908, %v1907
        %v1934 = vpack.c.b16 %v1910, %v1909
        %v1935 = vpack.c.b16 %v1912, %v1911
        %v1936 = vpack.c.b16 %v1914, %v1913
        %v1937 = vpack.c.b16 %v1916, %v1915
        %v1938 = vpack.c.b16 %v1918, %v1917
        %v1939 = vpack.c.b16 %v1920, %v1919
        %v1940 = vpack.c.b16 %v1922, %v1921
        %v1941 = vpack.c.b16 %v1924, %v1923
        %v1942 = vpack.c.b16 %v1926, %v1925
        %1959 = vmatpush.bf16.msra.mxu0 %v1934
        %1960 = vmatpush.bf16.msra.mxu0 %v1933
        %1961 = vmatpush.bf16.msra.mxu0 %v1932
        %1962 = vmatpush.bf16.msra.mxu0 %v1931
        %1963 = vmatpush.bf16.msra.mxu0 %v1930
        %1964 = vmatpush.bf16.msra.mxu0 %v1929
        %1965 = vmatpush.bf16.msra.mxu0 %v1928
        %1966 = vmatpush.bf16.msra.mxu0 %v1927
        %1967 = vmatmul.bf16.gmra.mxu0 %v1825
        %v1968 = vpop.f32.mrf.mxu0
        %v1969 = vadd.f32 %v1861, %v1968
        %v1970 = vpop.f32.mrf.mxu0
        %v1971 = vadd.f32 %v1861, %v1970
        %1972 = vdwg.mxu0
        %1973 = vmatpush.bf16.msra.mxu0 %v1942
        %1974 = vmatpush.bf16.msra.mxu0 %v1941
        %1975 = vmatpush.bf16.msra.mxu0 %v1940
        %1976 = vmatpush.bf16.msra.mxu0 %v1939
        %1977 = vmatpush.bf16.msra.mxu0 %v1938
        %1978 = vmatpush.bf16.msra.mxu0 %v1937
        %1979 = vmatpush.bf16.msra.mxu0 %v1936
        %1980 = vmatpush.bf16.msra.mxu0 %v1935
        %1981 = vmatmul.bf16.gmra.mxu0 %v1826
        %v1982 = vpop.f32.mrf.mxu0
        %v1983 = vadd.f32 %v1969, %v1982
        %v1984 = vpop.f32.mrf.mxu0
        %v1985 = vadd.f32 %v1971, %v1984
        %1986 = vdwg.mxu0
        %v1987 = vadd.f32 %v1983, %v1688
        %v1988 = vadd.f32 %v1985, %v1689
        %v1989 = vld [vmem:[%s726] sm:$0x1]
        %v1990 = vld [vmem:[%s729] sm:$0x1]
        %1991 = vadd.xlane.f32.xlu0 %v1987
        %v1992 = vpop.xlane.xlu0 %1991
        %1993 = vadd.xlane.f32.xlu0 %v1988
        %v1994 = vpop.xlane.xlu0 %1993
        %v1995 = vmul.f32 %v1992, %v1643
        %v1996 = vmul.f32 %v1994, %v1643
        %v1997 = vsub.f32 %v1987, %v1995
        %v1998 = vsub.f32 %v1988, %v1996
        %v1999 = vmul.f32 %v1997, %v1997
        %v2000 = vmul.f32 %v1998, %v1998
        %2001 = vadd.xlane.f32.xlu0 %v1999
        %v2002 = vpop.xlane.xlu0 %2001
        %2003 = vadd.xlane.f32.xlu0 %v2000
        %v2004 = vpop.xlane.xlu0 %2003
        %v2005 = vmul.f32 %v2002, %v1643
        %v2006 = vmul.f32 %v2004, %v1643
        %v2007 = vadd.f32 %v2005, 1e-05
        %v2008 = vadd.f32 %v2006, 1e-05
        %v2009 = vrsqrt.pop %v2007
        %v2010 = vmul.f32 %v2009, %v2007
        %v2011 = vmul.f32 %v2010, %v2009
        %v2012 = vmul.f32 0.5, %v2011
        %v2013 = vsub.f32 1.5, %v2012
        %v2014 = vmul.f32 %v2009, %v2013
        %vm2015 = vweird.f32 %v2007
        %vm2016 = vweird.f32 %v2009
        %vm2017 = vmor %vm2015, %vm2016
        %v2018 = vsel %vm2017, %v2009, %v2014
        %v2019 = vrsqrt.pop %v2008
        %v2020 = vmul.f32 %v2019, %v2008
        %v2021 = vmul.f32 %v2020, %v2019
        %v2022 = vmul.f32 0.5, %v2021
        %v2023 = vsub.f32 1.5, %v2022
        %v2024 = vmul.f32 %v2019, %v2023
        %vm2025 = vweird.f32 %v2008
        %vm2026 = vweird.f32 %v2019
        %vm2027 = vmor %vm2025, %vm2026
        %v2028 = vsel %vm2027, %v2019, %v2024
        %v2029 = vmul.f32 %v1997, %v2018
        %v2030 = vmul.f32 %v1998, %v2028
        %v2032 = vperm.slane %v1989, 0
        %v2034 = vmul.f32 %v2029, %v2032
        %v2035 = vmul.f32 %v2030, %v2032
        %v2037 = vperm.slane %v1990, 0
        %v2039 = vadd.f32 %v2034, %v2037
        %v2040 = vadd.f32 %v2035, %v2037
        %2041 = vst [vmem:[#allocation8] sm:$0xff] %v2039
        %2042 = vst [vmem:[#allocation8 + $0x8] sm:$0xff] %v2040
        %p2043 = scmp.lt.s32.totalorder %s34, 1
        %s2044 = scalar_select %p2043, %s34, 1
        %s2045 = smul.addr %s2044, 8
        %s2046 = smul.addr %s2045, 8
        %s2047 = scalar_lea.vmem %s15, %s2046
        // Predicated region
        $region93: #{_lambda_.1} parent=75 // pred_check
          %p2048 = pneg %p401
        $region94: #{_lambda_.1} parent=75 // pred_check_branch
          %2050 = sbr.rel (%p2048) target = $region96
        $region95: #{_lambda_.1} parent=75 // pred_region
          %2052 = vsyncadd [#allocation4], 0
          %s2053 = sshll.u32 [#allocation8], 4
          %s2054 = int_to_ptr.vmem [resolvable:$true] %s2053
          %s2055 = sshll.u32 %s14, 4
          %s2056 = int_to_ptr.hbm [resolvable:$true] %s2055
          %2061 = dma.vmem_to_hbm [thread:$0]  %s2054, 256, %s2056, [#allocation4], 128, 128, 8
        $region96: #{_lambda_.1} parent=75 // pred_fallthru
          _
        // Predicated region
        $region97: #{_lambda_.1} parent=75 // pred_check
          %p2062 = pneg %p427
        $region98: #{_lambda_.1} parent=75 // pred_check_branch
          %2064 = sbr.rel (%p2062) target = $region100
        $region99: #{_lambda_.1} parent=75 // pred_region
          _
        $region100: #{_lambda_.1} parent=75 // pred_fallthru
          _
        // Predicated region
        $region101: #{_lambda_.1} parent=75 // pred_check
          %p2065 = pneg %p401
        $region102: #{_lambda_.1} parent=75 // pred_check_branch
          %2067 = sbr.rel (%p2065) target = $region104
        $region103: #{_lambda_.1} parent=75 // pred_region
          %2069 = dma.done [#allocation4], 256
        $region104: #{_lambda_.1} parent=75 // pred_fallthru
          _
      $region76: #{_lambda_.1} parent=5 // pred_fallthru
        _
      %p2070 = scmp.le.s32.totalorder 2, %s29
      // Predicated region
      $region105: #{_lambda_.1} parent=5 // pred_check
        %p2071 = pneg %p2070
      $region106: #{_lambda_.1} parent=5 // pred_check_branch
        %2073 = sbr.rel (%p2071) target = $region108
      $region107: #{_lambda_.1} parent=5 // pred_region
        %s2074 = ssub.s32 %s29, 2
        // Predicated region
        $region109: #{_lambda_.1} parent=107 // pred_check
          %p2075 = pneg %p433
        $region110: #{_lambda_.1} parent=107 // pred_check_branch
          %2077 = sbr.rel (%p2075) target = $region112
        $region111: #{_lambda_.1} parent=107 // pred_region
          %p2078 = scmp.lt.s32.totalorder %s35, 1
          %s2079 = scalar_select %p2078, %s35, 1
          %s2080 = smul.addr %s2079, 8
          %s2081 = smul.addr %s2080, 8
          %s2082 = scalar_lea.vmem %s15, %s2081
        $region112: #{_lambda_.1} parent=107 // pred_fallthru
          _
      $region108: #{_lambda_.1} parent=5 // pred_fallthru
        _
    $region6: #{_lambda_.1} parent=1 // loop_footer
      %s33 = sadd.s32 1, %s29
    $region7: #{_lambda_.1} parent=1 // loop_footer_branch
      %28 = sbr.rel target = $region3
    $region8: #{_lambda_.1} parent=1 // loop_exit
      _
    %2083 = vsyncpa [#allocation3], 1
    %s2084 = scalar_lea.sflag [#allocation3], 1
    %2085 = vsyncpa %s2084, 1
    %2086 = vsyncpa [#allocation6], 1
    %s2087 = scalar_lea.sflag [#allocation6], 1
    %2088 = vsyncpa %s2087, 1
    %2089 = vsyncpa [#allocation4], 1
    %s2090 = scalar_lea.sflag [#allocation4], 1
    %2091 = vsyncpa %s2090, 1

</llo_original>
